<compile_context>
chip_gen: v6e
topology: v6e:2x2x1
jax: 0.10.0
libtpu: 0.0.40
codegen_flags: <defaults>
</compile_context>

<pallas_src>
import numpy as np
import jax
import jax.numpy as jnp
from jax.experimental import pallas as pl
from jax.experimental.pallas import tpu as pltpu

_EPS = 1e-5


# --------------------------------------------------------------------------
# Phase 1: 3x3 conv (one K=9*Cin matmul) + per-channel sum / sum-of-squares.
# --------------------------------------------------------------------------
def _conv3x3_and_stats(xpad_bf16, w_col_bf16, h, w):
    n = xpad_bf16.shape[0]
    c_in = xpad_bf16.shape[-1]
    c_out = w_col_bf16.shape[-1]
    hw = h * w

    def kernel(xpad_ref, w_ref, conv_ref, stats_ref):
        # stats output block index is constant across the grid -> resident
        # accumulator; zero it on the first step.
        @pl.when(pl.program_id(0) == 0)
        def _():
            stats_ref[...] = jnp.zeros_like(stats_ref)

        x = xpad_ref[0].astype(jnp.float32)                 # (h+2, w+2, c_in)
        # Nine shifted views -> (h, w, 9*c_in) column block, tap-major order
        # matching the (kh, kw, cin, cout) weight reshape.
        patches = [x[di:di + h, dj:dj + w, :]
                   for di in range(3) for dj in range(3)]
        col = jnp.concatenate(patches, axis=-1)             # (h, w, 9*c_in)
        col = col.reshape(hw, 9 * c_in).astype(jnp.bfloat16)

        acc = jnp.dot(col, w_ref[...],                      # one MXU matmul
                      preferred_element_type=jnp.float32)   # (hw, c_out) f32

        # Stats from the f32 accumulator (before the bf16 store).
        ssum = jnp.sum(acc, axis=0, keepdims=True)          # (1, c_out)
        ssq = jnp.sum(acc * acc, axis=0, keepdims=True)     # (1, c_out)
        stats_ref[...] += jnp.concatenate([ssum, ssq], axis=0)

        conv_ref[0] = acc.astype(conv_ref.dtype)            # bf16 store

    return pl.pallas_call(
        kernel,
        out_shape=(jax.ShapeDtypeStruct((n, hw, c_out), jnp.bfloat16),
                   jax.ShapeDtypeStruct((2, c_out), jnp.float32)),
        grid=(n,),
        in_specs=[pl.BlockSpec((1, h + 2, w + 2, c_in), lambda i: (i, 0, 0, 0)),
                  pl.BlockSpec((9 * c_in, c_out), lambda i: (0, 0))],
        out_specs=(pl.BlockSpec((1, hw, c_out), lambda i: (i, 0, 0)),
                   pl.BlockSpec((2, c_out), lambda i: (0, 0))),
        compiler_params=pltpu.CompilerParams(
            dimension_semantics=("arbitrary",)),   # stats accumulate over grid
    )(xpad_bf16, w_col_bf16)


# --------------------------------------------------------------------------
# Phase 2: y*scale + shift (+ residual) -> ReLU, gridded & lane-dense.
# --------------------------------------------------------------------------
def _affine_relu_kernel(y_ref, scale_ref, shift_ref, out_ref):
    y = y_ref[...].astype(jnp.float32) * scale_ref[...] + shift_ref[...]
    out_ref[...] = jnp.maximum(y, 0.0).astype(out_ref.dtype)


def _affine_res_relu_kernel(y_ref, scale_ref, shift_ref, res_ref, out_ref):
    y = (y_ref[...].astype(jnp.float32) * scale_ref[...] + shift_ref[...]
         + res_ref[...].astype(jnp.float32))
    out_ref[...] = jnp.maximum(y, 0.0).astype(out_ref.dtype)


def _pick_row_tile(rows):
    for t in (1024, 512, 256, 128, 64, 32, 16, 8):
        if rows % t == 0:
            return t
    return rows  # tiny / odd row counts: one full-extent block


def _bn_affine_res_relu(y_mc, scale_c, shift_c, res_mc, out_dtype):
    m, c = y_mc.shape
    if (m * c) % 128 == 0 and c <= 128 and 128 % c == 0:
        group = 128 // c                    # lane-dense view: (m*c/128, 128)
        rows, lanes = m // group, 128
    else:
        group, rows, lanes = 1, m, c        # fallback: masked (<128 lane) path

    y2 = y_mc.reshape(rows, lanes)
    s2 = jnp.tile(scale_c.reshape(1, c), (1, group))   # scale per lane
    b2 = jnp.tile(shift_c.reshape(1, c), (1, group))

    tr = _pick_row_tile(rows)
    row_spec = lambda i: (i, 0)
    vec_spec = lambda i: (0, 0)

    args = [y2, s2, b2]
    in_specs = [pl.BlockSpec((tr, lanes), row_spec),
                pl.BlockSpec((1, lanes), vec_spec),
                pl.BlockSpec((1, lanes), vec_spec)]
    if res_mc is None:
        kernel = _affine_relu_kernel
    else:
        kernel = _affine_res_relu_kernel
        args.append(res_mc.reshape(rows, lanes))
        in_specs.append(pl.BlockSpec((tr, lanes), row_spec))

    out = pl.pallas_call(
        kernel,
        out_shape=jax.ShapeDtypeStruct((rows, lanes), out_dtype),
        grid=(rows // tr,),
        in_specs=in_specs,
        out_specs=pl.BlockSpec((tr, lanes), row_spec),
        compiler_params=pltpu.CompilerParams(
            dimension_semantics=("parallel",)),
    )(*args)
    return out.reshape(m, c)


# --------------------------------------------------------------------------
# Parameter prep (hoisted out of the forward path) & BN stat folding.
# --------------------------------------------------------------------------
def prepare_params(params):
    """Precompute (9*Cin, Cout) bf16 column weights once; keep BN params f32."""
    def to_col(w_oihw):
        c_out, c_in = w_oihw.shape[0], w_oihw.shape[1]
        return (jnp.transpose(w_oihw, (2, 3, 1, 0))
                .reshape(9 * c_in, c_out).astype(jnp.bfloat16))
    return {
        "w1_col": to_col(params["w1"]),
        "w2_col": to_col(params["w2"]),
        "gamma1": params["gamma1"].astype(jnp.float32),
        "beta1": params["beta1"].astype(jnp.float32),
        "gamma2": params["gamma2"].astype(jnp.float32),
        "beta2": params["beta2"].astype(jnp.float32),
    }


def _fold_bn_scale_shift(stats, count, gamma, beta):
    """(2, C) sum / sumsq -> per-channel scale & shift (C-element math only)."""
    mean = stats[0] / count
    # One-pass variance E[x^2] - mean^2: slightly less numerically stable than
    # the two-pass form, fine in f32 at BN scales.
    var = stats[1] / count - mean * mean
    inv = jax.lax.rsqrt(var + _EPS)
    scale = gamma * inv
    shift = beta - mean * scale
    return scale, shift


# --------------------------------------------------------------------------
# Full RsBlock forward (stride=1, downsample=None, Cin == Cout).
# --------------------------------------------------------------------------
def rs_block_forward(x_nhwc, prepped):
    n, h, w, c = x_nhwc.shape
    c_out = prepped["w1_col"].shape[-1]
    m = n * h * w

    x32 = x_nhwc.astype(jnp.float32)
    x_bf = x_nhwc.astype(jnp.bfloat16)

    # conv1 -> bn1 -> relu   (no residual: dedicated kernel variant)
    xpad1 = jnp.pad(x_bf, ((0, 0), (1, 1), (1, 1), (0, 0)))
    conv1, stats1 = _conv3x3_and_stats(xpad1, prepped["w1_col"], h, w)
    scale1, shift1 = _fold_bn_scale_shift(stats1, m,
                                          prepped["gamma1"], prepped["beta1"])
    h1 = _bn_affine_res_relu(conv1.reshape(m, c_out), scale1, shift1,
                             res_mc=None, out_dtype=jnp.bfloat16)

    # conv2 -> bn2 -> (+ identity) -> relu
    xpad2 = jnp.pad(h1.reshape(n, h, w, c_out), ((0, 0), (1, 1), (1, 1), (0, 0)))
    conv2, stats2 = _conv3x3_and_stats(xpad2, prepped["w2_col"], h, w)
    scale2, shift2 = _fold_bn_scale_shift(stats2, m,
                                          prepped["gamma2"], prepped["beta2"])
    out = _bn_affine_res_relu(conv2.reshape(m, c_out), scale2, shift2,
                              res_mc=x32.reshape(m, c), out_dtype=jnp.float32)

    return out.reshape(n, h, w, c_out)


# --------------------------------------------------------------------------
# Plain-JAX reference mirroring the PyTorch forward (training-mode BN).
# --------------------------------------------------------------------------
def _reference_forward(x_nhwc, params):
    def conv(x, w_oihw):
        return jax.lax.conv_general_dilated(
            x, jnp.transpose(w_oihw, (2, 3, 1, 0)),        # HWIO
            window_strides=(1, 1), padding=((1, 1), (1, 1)),
            dimension_numbers=("NHWC", "HWIO", "NHWC"))

    def bn(x, g, b):
        mu = jnp.mean(x, axis=(0, 1, 2), keepdims=True)
        var = jnp.mean((x - mu) ** 2, axis=(0, 1, 2), keepdims=True)
        return (x - mu) * jax.lax.rsqrt(var + _EPS) * g + b

    h1 = jax.nn.relu(bn(conv(x_nhwc, params["w1"]),
                        params["gamma1"], params["beta1"]))
    out = bn(conv(h1, params["w2"]), params["gamma2"], params["beta2"]) + x_nhwc
    return jax.nn.relu(out)


if __name__ == "__main__":
    key = jax.random.PRNGKey(0)
    kx, k1, k2 = jax.random.split(key, 3)

    # RsBlock(in_channels=4, out_channels=4, stride=1, downsample=None)
    N, C, H, W = 2, 4, 16, 16
    x_nchw = jax.random.normal(kx, (N, C, H, W), jnp.float32)   # PyTorch NCHW
    x_nhwc = jnp.transpose(x_nchw, (0, 2, 3, 1))

    params = {
        "w1": 0.1 * jax.random.normal(k1, (C, C, 3, 3), jnp.float32),  # OIHW
        "w2": 0.1 * jax.random.normal(k2, (C, C, 3, 3), jnp.float32),  # OIHW
        "gamma1": jnp.ones((C,), jnp.float32),   # BatchNorm2d default init
        "beta1": jnp.zeros((C,), jnp.float32),
        "gamma2": jnp.ones((C,), jnp.float32),
        "beta2": jnp.zeros((C,), jnp.float32),
    }

    prepped = prepare_params(params)             # weight prep hoisted, done once
    out_nhwc = jax.block_until_ready(rs_block_forward(x_nhwc, prepped))
    out_nchw = jnp.transpose(out_nhwc, (0, 3, 1, 2))   # back to PyTorch layout

    ref_nhwc = _reference_forward(x_nhwc, params)
    np.testing.assert_allclose(np.asarray(out_nhwc), np.asarray(ref_nhwc),
                               atol=5e-2, rtol=5e-2)
    assert out_nchw.shape == (N, C, H, W)
    print("KERNEL_OK")
</pallas_src>

<mosaic_0001>
module attributes {stable_mosaic.version = 11 : i64} {
  func.func @kernel(%arg0: i32, %arg1: memref<1x18x18x4xbf16, #tpu.memory_space<vmem>>, %arg2: memref<36x4xbf16, #tpu.memory_space<vmem>>, %arg3: memref<1x256x4xbf16, #tpu.memory_space<vmem>>, %arg4: memref<2x4xf32, #tpu.memory_space<vmem>>) attributes {dimension_semantics = [#tpu.dimension_semantics<arbitrary>], iteration_bounds = array<i64: 2>, scalar_prefetch = 0 : i64, scratch_operands = 0 : i64, tpu.core_type = #tpu.core_type<tc>, window_params = [{transform_indices = @transform_0, window_bounds = array<i64: 1, 18, 18, 4>}, {pipeline_mode = #tpu.pipeline_mode<synchronous>, transform_indices = @transform_1, window_bounds = array<i64: 36, 4>}, {transform_indices = @transform_2, window_bounds = array<i64: 1, 256, 4>}, {pipeline_mode = #tpu.pipeline_mode<synchronous>, transform_indices = @transform_3, window_bounds = array<i64: 2, 4>}]} {
    %c0_i32 = arith.constant 0 : i32
    %0 = arith.cmpi eq, %arg0, %c0_i32 : i32
    %1 = arith.extui %0 : i1 to i32
    %c0_i32_0 = arith.constant 0 : i32
    %2 = arith.cmpi ne, %1, %c0_i32_0 : i32
    scf.if %2 {
      %cst_15 = arith.constant 0.000000e+00 : f32
      %33 = vector.broadcast %cst_15 : f32 to vector<2x4xf32>
      %c0_16 = arith.constant 0 : index
      %c0_17 = arith.constant 0 : index
      %34 = vector.load %arg4[%c0_16, %c0_17] : memref<2x4xf32, #tpu.memory_space<vmem>>, vector<2x4xf32>
      tpu.vector_store %arg4[%c0_16, %c0_17], %33 {strides = array<i32>} : memref<2x4xf32, #tpu.memory_space<vmem>>, vector<2x4xf32>,
    } else {
    }
    %c0 = arith.constant 0 : index
    %c0_1 = arith.constant 0 : index
    %c0_2 = arith.constant 0 : index
    %c0_3 = arith.constant 0 : index
    %3 = vector.load %arg1[%c0, %c0_1, %c0_2, %c0_3] : memref<1x18x18x4xbf16, #tpu.memory_space<vmem>>, vector<1x18x18x4xbf16>
    %4 = vector.shape_cast %3 : vector<1x18x18x4xbf16> to vector<18x18x4xbf16>
    %5 = arith.extf %4 : vector<18x18x4xbf16> to vector<18x18x4xf32>
    %6 = vector.extract_strided_slice %5 {offsets = [0, 0, 0], sizes = [16, 16, 4], strides = [1, 1, 1]} : vector<18x18x4xf32> to vector<16x16x4xf32>
    %7 = vector.extract_strided_slice %5 {offsets = [0, 1, 0], sizes = [16, 16, 4], strides = [1, 1, 1]} : vector<18x18x4xf32> to vector<16x16x4xf32>
    %8 = vector.extract_strided_slice %5 {offsets = [0, 2, 0], sizes = [16, 16, 4], strides = [1, 1, 1]} : vector<18x18x4xf32> to vector<16x16x4xf32>
    %9 = vector.extract_strided_slice %5 {offsets = [1, 0, 0], sizes = [16, 16, 4], strides = [1, 1, 1]} : vector<18x18x4xf32> to vector<16x16x4xf32>
    %10 = vector.extract_strided_slice %5 {offsets = [1, 1, 0], sizes = [16, 16, 4], strides = [1, 1, 1]} : vector<18x18x4xf32> to vector<16x16x4xf32>
    %11 = vector.extract_strided_slice %5 {offsets = [1, 2, 0], sizes = [16, 16, 4], strides = [1, 1, 1]} : vector<18x18x4xf32> to vector<16x16x4xf32>
    %12 = vector.extract_strided_slice %5 {offsets = [2, 0, 0], sizes = [16, 16, 4], strides = [1, 1, 1]} : vector<18x18x4xf32> to vector<16x16x4xf32>
    %13 = vector.extract_strided_slice %5 {offsets = [2, 1, 0], sizes = [16, 16, 4], strides = [1, 1, 1]} : vector<18x18x4xf32> to vector<16x16x4xf32>
    %14 = vector.extract_strided_slice %5 {offsets = [2, 2, 0], sizes = [16, 16, 4], strides = [1, 1, 1]} : vector<18x18x4xf32> to vector<16x16x4xf32>
    %15 = tpu.concatenate %6, %7, %8, %9, %10, %11, %12, %13, %14 in 2 : vector<16x16x4xf32>, vector<16x16x4xf32>, vector<16x16x4xf32>, vector<16x16x4xf32>, vector<16x16x4xf32>, vector<16x16x4xf32>, vector<16x16x4xf32>, vector<16x16x4xf32>, vector<16x16x4xf32> -> vector<16x16x36xf32>
    %16 = vector.shape_cast %15 : vector<16x16x36xf32> to vector<256x36xf32>
    %17 = arith.truncf %16 : vector<256x36xf32> to vector<256x36xbf16>
    %c0_4 = arith.constant 0 : index
    %c0_5 = arith.constant 0 : index
    %18 = vector.load %arg2[%c0_4, %c0_5] : memref<36x4xbf16, #tpu.memory_space<vmem>>, vector<36x4xbf16>
    %cst = arith.constant dense<0.000000e+00> : vector<256x4xf32>
    %19 = tpu.matmul %17, %18, %cst {dimension_numbers = #tpu.dot_dimension_numbers<[1], [0], [0], [1], [0, 0, 1, 1], [], []>} : vector<256x36xbf16>, vector<36x4xbf16>, vector<256x4xf32> -> vector<256x4xf32>
    %cst_6 = arith.constant dense<0.000000e+00> : vector<4xf32>
    %20 = vector.multi_reduction <add>, %19, %cst_6 [0] : vector<256x4xf32> to vector<4xf32>
    %21 = vector.shape_cast %20 : vector<4xf32> to vector<1x4xf32>
    %22 = arith.mulf %19, %19 : vector<256x4xf32>
    %cst_7 = arith.constant dense<0.000000e+00> : vector<4xf32>
    %23 = vector.multi_reduction <add>, %22, %cst_7 [0] : vector<256x4xf32> to vector<4xf32>
    %24 = vector.shape_cast %23 : vector<4xf32> to vector<1x4xf32>
    %c0_8 = arith.constant 0 : index
    %c0_9 = arith.constant 0 : index
    %25 = vector.load %arg4[%c0_8, %c0_9] : memref<2x4xf32, #tpu.memory_space<vmem>>, vector<2x4xf32>
    %26 = tpu.concatenate %21, %24 in 0 : vector<1x4xf32>, vector<1x4xf32> -> vector<2x4xf32>
    %27 = arith.addf %25, %26 : vector<2x4xf32>
    %c0_10 = arith.constant 0 : index
    %c0_11 = arith.constant 0 : index
    %28 = vector.load %arg4[%c0_10, %c0_11] : memref<2x4xf32, #tpu.memory_space<vmem>>, vector<2x4xf32>
    tpu.vector_store %arg4[%c0_10, %c0_11], %27 {strides = array<i32>} : memref<2x4xf32, #tpu.memory_space<vmem>>, vector<2x4xf32>,
    %29 = arith.truncf %19 : vector<256x4xf32> to vector<256x4xbf16>
    %c0_12 = arith.constant 0 : index
    %c0_13 = arith.constant 0 : index
    %c0_14 = arith.constant 0 : index
    %30 = vector.load %arg3[%c0_12, %c0_13, %c0_14] : memref<1x256x4xbf16, #tpu.memory_space<vmem>>, vector<1x256x4xbf16>
    %31 = vector.shape_cast %30 : vector<1x256x4xbf16> to vector<256x4xbf16>
    %32 = vector.shape_cast %29 : vector<256x4xbf16> to vector<1x256x4xbf16>
    tpu.vector_store %arg3[%c0_12, %c0_13, %c0_14], %32 {strides = array<i32>} : memref<1x256x4xbf16, #tpu.memory_space<vmem>>, vector<1x256x4xbf16>,
    return
  }
  func.func @transform_0(%arg0: i32) -> (i32, i32, i32, i32) {
    %c0_i32 = arith.constant 0 : i32
    %c0_i32_0 = arith.constant 0 : i32
    %c0_i32_1 = arith.constant 0 : i32
    %c0_i32_2 = arith.constant 0 : i32
    return %arg0, %c0_i32, %c0_i32_0, %c0_i32_1 : i32, i32, i32, i32
  }
  func.func @transform_1(%arg0: i32) -> (i32, i32) {
    %c0_i32 = arith.constant 0 : i32
    %c0_i32_0 = arith.constant 0 : i32
    %c0_i32_1 = arith.constant 0 : i32
    return %c0_i32, %c0_i32_0 : i32, i32
  }
  func.func @transform_2(%arg0: i32) -> (i32, i32, i32) {
    %c0_i32 = arith.constant 0 : i32
    %c0_i32_0 = arith.constant 0 : i32
    %c0_i32_1 = arith.constant 0 : i32
    return %arg0, %c0_i32, %c0_i32_0 : i32, i32, i32
  }
  func.func @transform_3(%arg0: i32) -> (i32, i32) {
    %c0_i32 = arith.constant 0 : i32
    %c0_i32_0 = arith.constant 0 : i32
    %c0_i32_1 = arith.constant 0 : i32
    return %c0_i32, %c0_i32_0 : i32, i32
  }
}

</mosaic_0001>

<llo_original>
// kernel: tpu_custom_call.1
$region0: #{tpu_custom_call.1}
  #allocation0 [shape = 'u32[]', space=smem, size = 0x4, offset = 0x4, fixed_abs, tag = 'smem constant byte address 0x4 - core index']
  #allocation1 [shape = 'u32[144,128]{1,0:T(1,128)}', space=vmem, size = 0x12000, scoped, tag = 'internal scratch']
  %s0 = inlined_call_operand.vmem [shape: bf16[2,18,18,4], index: 0, kind: input, shape index: {}]
  %s1 = inlined_call_operand.vmem [shape: bf16[36,4], index: 1, kind: input, shape index: {}]
  %s2 = inlined_call_operand.vmem [shape: bf16[2,256,4], index: 2, kind: output, shape index: {0}]
  %s3 = inlined_call_operand.hbm [shape: f32[2,4], index: 3, kind: output, shape index: {1}]
  %4 = xla_tuple %s2, %s3
  %s5 = sld [smem:[#allocation0]]
  $region53: #{tpu_custom_call.1} parent=0
    _
  %s7 = ssub.s32 1, %s5
  %s8 = scalar_select 0, %s7, %s5
  $region1: #{tpu_custom_call.1} parent=0
    #allocation2 [shape = 'u8[1024]{0}', space=vmem, size = 0x400, scoped, tag = 'output window, operand 1, single buffered']
    #allocation3 [shape = 's32[2]{0}', space=sflag, size = 0x8, scoped, tag = 'scoped memory for tpu_custom_call.1']
    %9 = vsyncpa [#allocation3], 0
    loop: start=0, step=1, limit=4
    $region2: #{tpu_custom_call.1} parent=1 // loop_pre_header
      _
    $region3: #{tpu_custom_call.1} parent=1 // loop_header
      %s11 = sphi 0, %s15
      %p12 = scmp.ge.s32.totalorder %s11, 4
      %s21 = sphi 0, %s23
      %s24 = sphi 0, %s21
      %s25 = sphi 0, %s24
      %s41 = sphi 0, %s25
      %s45 = sphi 0, %s45
      %s47 = sphi 0, %s45
      %s48 = sphi 0, %s47
      %s62 = sphi 0, %s48
      %s68 = sphi 0, %s70
      %s71 = sphi 0, %s68
      %s72 = sphi 0, %s71
      %s88 = sphi 0, %s72
      %s92 = sphi 0, %s92
      %s94 = sphi 0, %s92
      %s95 = sphi 0, %s94
      %s109 = sphi 0, %s95
    $region4: #{tpu_custom_call.1} parent=1 // loop_header_branch
      %14 = sbr.rel (%p12) target = $region8
    $region5: #{tpu_custom_call.1} parent=1 // loop_body
      %s16 = ssub.s32 %s11, 1
      %s17 = ssub.s32 %s11, 2
      %s18 = sadd.s32 %s11, 1
      %s19 = ssub.s32 %s11, %s18
      %p20 = scmp.eq.s32.totalorder %s19, 0
      %s22 = sadd.s32 %s21, 1
      %s23 = scalar_select %p20, %s21, %s22
      %p26 = pneg %p20
      %p27 = scmp.eq.s32.totalorder %s11, 1
      %p28 = por %p26, %p27
      %p29 = scmp.ne.s32.totalorder %s21, %s24
      %p30 = scmp.eq.s32.totalorder %s11, 0
      %p31 = por %p29, %p30
      %p32 = scmp.ne.s32.totalorder %s21, %s24
      %p33 = scmp.eq.s32.totalorder %s16, 1
      %p34 = por %p32, %p33
      %p35 = scmp.ne.s32.totalorder %s24, %s25
      %p36 = scmp.eq.s32.totalorder %s16, 0
      %p37 = por %p35, %p36
      %p38 = scmp.ne.s32.totalorder %s24, %s25
      %p39 = scmp.eq.s32.totalorder %s17, 1
      %p40 = por %p38, %p39
      %p42 = scmp.ne.s32.totalorder %s25, %s41
      %p43 = scmp.eq.s32.totalorder %s17, 0
      %p44 = por %p42, %p43
      %s46 = sadd.s32 %s45, 1
      %p49 = scmp.eq.s32.totalorder %s11, 1
      %p50 = scmp.ne.s32.totalorder %s45, %s47
      %p51 = scmp.eq.s32.totalorder %s11, 0
      %p52 = por %p50, %p51
      %p53 = scmp.ne.s32.totalorder %s45, %s47
      %p54 = scmp.eq.s32.totalorder %s16, 1
      %p55 = por %p53, %p54
      %p56 = scmp.ne.s32.totalorder %s47, %s48
      %p57 = scmp.eq.s32.totalorder %s16, 0
      %p58 = por %p56, %p57
      %p59 = scmp.ne.s32.totalorder %s47, %s48
      %p60 = scmp.eq.s32.totalorder %s17, 1
      %p61 = por %p59, %p60
      %p63 = scmp.ne.s32.totalorder %s48, %s62
      %p64 = scmp.eq.s32.totalorder %s17, 0
      %p65 = por %p63, %p64
      %s66 = ssub.s32 %s11, %s18
      %p67 = scmp.eq.s32.totalorder %s66, 0
      %s69 = sadd.s32 %s68, 1
      %s70 = scalar_select %p67, %s68, %s69
      %p73 = pneg %p67
      %p74 = scmp.eq.s32.totalorder %s11, 1
      %p75 = por %p73, %p74
      %p76 = scmp.ne.s32.totalorder %s68, %s71
      %p77 = scmp.eq.s32.totalorder %s11, 0
      %p78 = por %p76, %p77
      %p79 = scmp.ne.s32.totalorder %s68, %s71
      %p80 = scmp.eq.s32.totalorder %s16, 1
      %p81 = por %p79, %p80
      %p82 = scmp.ne.s32.totalorder %s71, %s72
      %p83 = scmp.eq.s32.totalorder %s16, 0
      %p84 = por %p82, %p83
      %p85 = scmp.ne.s32.totalorder %s71, %s72
      %p86 = scmp.eq.s32.totalorder %s17, 1
      %p87 = por %p85, %p86
      %p89 = scmp.ne.s32.totalorder %s72, %s88
      %p90 = scmp.eq.s32.totalorder %s17, 0
      %p91 = por %p89, %p90
      %s93 = sadd.s32 %s92, 1
      %p96 = scmp.eq.s32.totalorder %s11, 1
      %p97 = scmp.ne.s32.totalorder %s92, %s94
      %p98 = scmp.eq.s32.totalorder %s11, 0
      %p99 = por %p97, %p98
      %p100 = scmp.ne.s32.totalorder %s92, %s94
      %p101 = scmp.eq.s32.totalorder %s16, 1
      %p102 = por %p100, %p101
      %p103 = scmp.ne.s32.totalorder %s94, %s95
      %p104 = scmp.eq.s32.totalorder %s16, 0
      %p105 = por %p103, %p104
      %p106 = scmp.ne.s32.totalorder %s94, %s95
      %p107 = scmp.eq.s32.totalorder %s17, 1
      %p108 = por %p106, %p107
      %p110 = scmp.ne.s32.totalorder %s95, %s109
      %p111 = scmp.eq.s32.totalorder %s17, 0
      %p112 = por %p110, %p111
      %p113 = scmp.le.s32.totalorder 1, %s11
      %p114 = scmp.lt.s32.totalorder %s11, 3
      %p115 = pnand %p113, %p114
      %p116 = pneg %p115
      // Predicated region
      $region9: #{tpu_custom_call.1} parent=5 // pred_check
        _
      $region10: #{tpu_custom_call.1} parent=5 // pred_check_branch
        %118 = sbr.rel (%p115) target = $region12
      $region11: #{tpu_custom_call.1} parent=5 // pred_region
        %s119 = ssub.s32 %s11, 1
        // Predicated region
        $region13: #{tpu_custom_call.1} parent=11 // pred_check
          %p120 = pneg %p58
        $region14: #{tpu_custom_call.1} parent=11 // pred_check_branch
          %122 = sbr.rel (%p120) target = $region16
        $region15: #{tpu_custom_call.1} parent=11 // pred_region
          _
        $region16: #{tpu_custom_call.1} parent=11 // pred_fallthru
          _
      $region12: #{tpu_custom_call.1} parent=5 // pred_fallthru
        _
      %p123 = scmp.lt.s32.totalorder %s11, 2
      // Predicated region
      $region17: #{tpu_custom_call.1} parent=5 // pred_check
        %p124 = pneg %p123
      $region18: #{tpu_custom_call.1} parent=5 // pred_check_branch
        %126 = sbr.rel (%p124) target = $region20
      $region19: #{tpu_custom_call.1} parent=5 // pred_region
        // Predicated region
        $region21: #{tpu_custom_call.1} parent=19 // pred_check
          %p127 = pneg %p31
        $region22: #{tpu_custom_call.1} parent=19 // pred_check_branch
          %129 = sbr.rel (%p127) target = $region24
        $region23: #{tpu_custom_call.1} parent=19 // pred_region
          %p130 = scmp.lt.s32.totalorder %s11, 1
          %s131 = scalar_select %p130, %s11, 1
          %s132 = smul.addr %s131, 54
          %s133 = smul.addr %s132, 4
          %s134 = scalar_lea.vmem %s0, %s133
        $region24: #{tpu_custom_call.1} parent=19 // pred_fallthru
          _
      $region20: #{tpu_custom_call.1} parent=5 // pred_fallthru
        _
      %p135 = scmp.le.s32.totalorder 1, %s11
      %p136 = scmp.lt.s32.totalorder %s11, 3
      %p137 = pnand %p135, %p136
      %p138 = pneg %p137
      // Predicated region
      $region25: #{tpu_custom_call.1} parent=5 // pred_check
        _
      $region26: #{tpu_custom_call.1} parent=5 // pred_check_branch
        %140 = sbr.rel (%p137) target = $region28
      $region27: #{tpu_custom_call.1} parent=5 // pred_region
        %s141 = ssub.s32 %s11, 1
        %p142 = scmp.lt.s32.totalorder %s16, 1
        %s143 = scalar_select %p142, %s16, 1
        %s144 = smul.addr %s143, 54
        %s145 = smul.addr %s144, 4
        %s146 = scalar_lea.vmem %s0, %s145
        %p147 = pneg %p37
        %p148 = pneg %p34
        %p149 = pneg %p58
        %p150 = pneg %p55
        %p151 = pneg %p84
        %p152 = pneg %p81
        %p153 = scmp.lt.s32.totalorder %s16, 1
        %s154 = scalar_select %p153, %s16, 1
        %s155 = smul.addr %s154, 32
        %s156 = smul.addr %s155, 4
        %s157 = scalar_lea.vmem %s2, %s156
        %p158 = pneg %p105
        %p159 = pneg %p102
        %p160 = scmp.lt.s32.totalorder %s16, 1
        %s161 = scalar_select %p160, %s16, 1
        %s162 = smul.addr %s161, 54
        %s163 = smul.addr %s162, 4
        %s164 = scalar_lea.vmem %s0, %s163
        %p165 = scmp.lt.s32.totalorder %s16, 1
        %s166 = scalar_select %p165, %s16, 1
        %s167 = smul.addr %s166, 32
        %s168 = smul.addr %s167, 4
        %s169 = scalar_lea.vmem %s2, %s168
        %p171 = scmp.eq.s32.totalorder %s16, 0
        // Predicated region
        $region29: #{tpu_custom_call.1} parent=27 // pred_check
          %p172 = pneg %p171
        $region30: #{tpu_custom_call.1} parent=27 // pred_check_branch
          %174 = sbr.rel (%p172) target = $region32
        $region31: #{tpu_custom_call.1} parent=27 // pred_region
          %vm175 = vcmask 25600
          %176 = vst.msk [vmem:[#allocation2] sm:$0x3] %vm175, 0.0
        $region32: #{tpu_custom_call.1} parent=27 // pred_fallthru
          _
        %v177 = vld [vmem:[%s164] sm:$0xf]
        %v178 = vld [vmem:[%s164 + $0x4] sm:$0xf]
        %v179 = vld [vmem:[%s164 + $0x8] sm:$0x1]
        %v180 = vld [vmem:[%s164 + $0xc] sm:$0xf]
        %v181 = vld [vmem:[%s164 + $0x10] sm:$0xf]
        %v182 = vld [vmem:[%s164 + $0x14] sm:$0x1]
        %v183 = vld [vmem:[%s164 + $0x18] sm:$0xf]
        %v184 = vld [vmem:[%s164 + $0x1c] sm:$0xf]
        %v185 = vld [vmem:[%s164 + $0x20] sm:$0x1]
        %v186 = vld [vmem:[%s164 + $0x24] sm:$0xf]
        %v187 = vld [vmem:[%s164 + $0x28] sm:$0xf]
        %v188 = vld [vmem:[%s164 + $0x2c] sm:$0x1]
        %v189 = vld [vmem:[%s164 + $0x30] sm:$0xf]
        %v190 = vld [vmem:[%s164 + $0x34] sm:$0xf]
        %v191 = vld [vmem:[%s164 + $0x38] sm:$0x1]
        %v192 = vld [vmem:[%s164 + $0x3c] sm:$0xf]
        %v193 = vld [vmem:[%s164 + $0x40] sm:$0xf]
        %v194 = vld [vmem:[%s164 + $0x44] sm:$0x1]
        %v195 = vld [vmem:[%s164 + $0x48] sm:$0xf]
        %v196 = vld [vmem:[%s164 + $0x4c] sm:$0xf]
        %v197 = vld [vmem:[%s164 + $0x50] sm:$0x1]
        %v198 = vld [vmem:[%s164 + $0x54] sm:$0xf]
        %v199 = vld [vmem:[%s164 + $0x58] sm:$0xf]
        %v200 = vld [vmem:[%s164 + $0x5c] sm:$0x1]
        %v201 = vld [vmem:[%s164 + $0x60] sm:$0xf]
        %v202 = vld [vmem:[%s164 + $0x64] sm:$0xf]
        %v203 = vld [vmem:[%s164 + $0x68] sm:$0x1]
        %v204 = vld [vmem:[%s164 + $0x6c] sm:$0xf]
        %v205 = vld [vmem:[%s164 + $0x70] sm:$0xf]
        %v206 = vld [vmem:[%s164 + $0x74] sm:$0x1]
        %v207 = vld [vmem:[%s164 + $0x78] sm:$0xf]
        %v208 = vld [vmem:[%s164 + $0x7c] sm:$0xf]
        %v209 = vld [vmem:[%s164 + $0x80] sm:$0x1]
        %v210 = vld [vmem:[%s164 + $0x84] sm:$0xf]
        %v211 = vld [vmem:[%s164 + $0x88] sm:$0xf]
        %v212 = vld [vmem:[%s164 + $0x8c] sm:$0x1]
        %v213 = vld [vmem:[%s164 + $0x90] sm:$0xf]
        %v214 = vld [vmem:[%s164 + $0x94] sm:$0xf]
        %v215 = vld [vmem:[%s164 + $0x98] sm:$0x1]
        %v216 = vld [vmem:[%s164 + $0x9c] sm:$0xf]
        %v217 = vld [vmem:[%s164 + $0xa0] sm:$0xf]
        %v218 = vld [vmem:[%s164 + $0xa4] sm:$0x1]
        %v219 = vld [vmem:[%s164 + $0xa8] sm:$0xf]
        %v220 = vld [vmem:[%s164 + $0xac] sm:$0xf]
        %v221 = vld [vmem:[%s164 + $0xb0] sm:$0x1]
        %v222 = vld [vmem:[%s164 + $0xb4] sm:$0xf]
        %v223 = vld [vmem:[%s164 + $0xb8] sm:$0xf]
        %v224 = vld [vmem:[%s164 + $0xbc] sm:$0x1]
        %v225 = vld [vmem:[%s164 + $0xc0] sm:$0xf]
        %v226 = vld [vmem:[%s164 + $0xc4] sm:$0xf]
        %v227 = vld [vmem:[%s164 + $0xc8] sm:$0x1]
        %v228 = vld [vmem:[%s164 + $0xcc] sm:$0xf]
        %v229 = vld [vmem:[%s164 + $0xd0] sm:$0xf]
        %v230 = vld [vmem:[%s164 + $0xd4] sm:$0x1]
        %v231 = vunpack.c.l.bf16 %v177
        %v232 = vunpack.c.l.bf16 %v178
        %v233 = vunpack.c.l.bf16 %v179
        %v234 = vunpack.c.l.bf16 %v180
        %v235 = vunpack.c.l.bf16 %v181
        %v236 = vunpack.c.l.bf16 %v182
        %v237 = vunpack.c.l.bf16 %v183
        %v238 = vunpack.c.l.bf16 %v184
        %v239 = vunpack.c.l.bf16 %v185
        %v240 = vunpack.c.l.bf16 %v186
        %v241 = vunpack.c.l.bf16 %v187
        %v242 = vunpack.c.l.bf16 %v188
        %v243 = vunpack.c.l.bf16 %v189
        %v244 = vunpack.c.l.bf16 %v190
        %v245 = vunpack.c.l.bf16 %v191
        %v246 = vunpack.c.l.bf16 %v192
        %v247 = vunpack.c.l.bf16 %v193
        %v248 = vunpack.c.l.bf16 %v194
        %v249 = vunpack.c.l.bf16 %v195
        %v250 = vunpack.c.l.bf16 %v196
        %v251 = vunpack.c.l.bf16 %v197
        %v252 = vunpack.c.l.bf16 %v198
        %v253 = vunpack.c.l.bf16 %v199
        %v254 = vunpack.c.l.bf16 %v200
        %v255 = vunpack.c.l.bf16 %v201
        %v256 = vunpack.c.l.bf16 %v202
        %v257 = vunpack.c.l.bf16 %v203
        %v258 = vunpack.c.l.bf16 %v204
        %v259 = vunpack.c.l.bf16 %v205
        %v260 = vunpack.c.l.bf16 %v206
        %v261 = vunpack.c.l.bf16 %v207
        %v262 = vunpack.c.l.bf16 %v208
        %v263 = vunpack.c.l.bf16 %v209
        %v264 = vunpack.c.l.bf16 %v210
        %v265 = vunpack.c.l.bf16 %v211
        %v266 = vunpack.c.l.bf16 %v212
        %v267 = vunpack.c.l.bf16 %v213
        %v268 = vunpack.c.l.bf16 %v214
        %v269 = vunpack.c.l.bf16 %v215
        %v270 = vunpack.c.l.bf16 %v216
        %v271 = vunpack.c.l.bf16 %v217
        %v272 = vunpack.c.l.bf16 %v218
        %v273 = vunpack.c.l.bf16 %v219
        %v274 = vunpack.c.l.bf16 %v220
        %v275 = vunpack.c.l.bf16 %v221
        %v276 = vunpack.c.l.bf16 %v222
        %v277 = vunpack.c.l.bf16 %v223
        %v278 = vunpack.c.l.bf16 %v224
        %v279 = vunpack.c.l.bf16 %v225
        %v280 = vunpack.c.l.bf16 %v226
        %v281 = vunpack.c.l.bf16 %v227
        %v282 = vunpack.c.l.bf16 %v228
        %v283 = vunpack.c.l.bf16 %v229
        %v284 = vunpack.c.l.bf16 %v230
        %vm333 = vcmask 1046528
        %v334 = vrot.slane %v231, 1
        %v335 = vrot.slane %v232, 1
        %v336 = vsel %vm333, %v334, %v335
        %v337 = vrot.slane %v233, 1
        %v338 = vsel %vm333, %v335, %v337
        %v339 = vrot.slane %v234, 1
        %v340 = vrot.slane %v235, 1
        %v341 = vsel %vm333, %v339, %v340
        %v342 = vrot.slane %v236, 1
        %v343 = vsel %vm333, %v340, %v342
        %v344 = vrot.slane %v237, 1
        %v345 = vrot.slane %v238, 1
        %v346 = vsel %vm333, %v344, %v345
        %v347 = vrot.slane %v239, 1
        %v348 = vsel %vm333, %v345, %v347
        %v349 = vrot.slane %v240, 1
        %v350 = vrot.slane %v241, 1
        %v351 = vsel %vm333, %v349, %v350
        %v352 = vrot.slane %v242, 1
        %v353 = vsel %vm333, %v350, %v352
        %v354 = vrot.slane %v243, 1
        %v355 = vrot.slane %v244, 1
        %v356 = vsel %vm333, %v354, %v355
        %v357 = vrot.slane %v245, 1
        %v358 = vsel %vm333, %v355, %v357
        %v359 = vrot.slane %v246, 1
        %v360 = vrot.slane %v247, 1
        %v361 = vsel %vm333, %v359, %v360
        %v362 = vrot.slane %v248, 1
        %v363 = vsel %vm333, %v360, %v362
        %v364 = vrot.slane %v249, 1
        %v365 = vrot.slane %v250, 1
        %v366 = vsel %vm333, %v364, %v365
        %v367 = vrot.slane %v251, 1
        %v368 = vsel %vm333, %v365, %v367
        %v369 = vrot.slane %v252, 1
        %v370 = vrot.slane %v253, 1
        %v371 = vsel %vm333, %v369, %v370
        %v372 = vrot.slane %v254, 1
        %v373 = vsel %vm333, %v370, %v372
        %v374 = vrot.slane %v255, 1
        %v375 = vrot.slane %v256, 1
        %v376 = vsel %vm333, %v374, %v375
        %v377 = vrot.slane %v257, 1
        %v378 = vsel %vm333, %v375, %v377
        %v379 = vrot.slane %v258, 1
        %v380 = vrot.slane %v259, 1
        %v381 = vsel %vm333, %v379, %v380
        %v382 = vrot.slane %v260, 1
        %v383 = vsel %vm333, %v380, %v382
        %v384 = vrot.slane %v261, 1
        %v385 = vrot.slane %v262, 1
        %v386 = vsel %vm333, %v384, %v385
        %v387 = vrot.slane %v263, 1
        %v388 = vsel %vm333, %v385, %v387
        %v389 = vrot.slane %v264, 1
        %v390 = vrot.slane %v265, 1
        %v391 = vsel %vm333, %v389, %v390
        %v392 = vrot.slane %v266, 1
        %v393 = vsel %vm333, %v390, %v392
        %v394 = vrot.slane %v267, 1
        %v395 = vrot.slane %v268, 1
        %v396 = vsel %vm333, %v394, %v395
        %v397 = vrot.slane %v269, 1
        %v398 = vsel %vm333, %v395, %v397
        %v399 = vrot.slane %v270, 1
        %v400 = vrot.slane %v271, 1
        %v401 = vsel %vm333, %v399, %v400
        %v402 = vrot.slane %v272, 1
        %v403 = vsel %vm333, %v400, %v402
        %v404 = vrot.slane %v273, 1
        %v405 = vrot.slane %v274, 1
        %v406 = vsel %vm333, %v404, %v405
        %v407 = vrot.slane %v275, 1
        %v408 = vsel %vm333, %v405, %v407
        %v409 = vrot.slane %v276, 1
        %v410 = vrot.slane %v277, 1
        %v411 = vsel %vm333, %v409, %v410
        %v412 = vrot.slane %v278, 1
        %v413 = vsel %vm333, %v410, %v412
        %414 = vrot.lane.b32.xlu0 %v336, 4
        %v415 = vpop.permute.xlu0 %414
        %416 = vrot.lane.b32.xlu0 %v338, 4
        %v417 = vpop.permute.xlu0 %416
        %418 = vrot.lane.b32.xlu0 %v341, 4
        %v419 = vpop.permute.xlu0 %418
        %420 = vrot.lane.b32.xlu0 %v343, 4
        %v421 = vpop.permute.xlu0 %420
        %422 = vrot.lane.b32.xlu0 %v346, 4
        %v423 = vpop.permute.xlu0 %422
        %424 = vrot.lane.b32.xlu0 %v348, 4
        %v425 = vpop.permute.xlu0 %424
        %426 = vrot.lane.b32.xlu0 %v351, 4
        %v427 = vpop.permute.xlu0 %426
        %428 = vrot.lane.b32.xlu0 %v353, 4
        %v429 = vpop.permute.xlu0 %428
        %430 = vrot.lane.b32.xlu0 %v356, 4
        %v431 = vpop.permute.xlu0 %430
        %432 = vrot.lane.b32.xlu0 %v358, 4
        %v433 = vpop.permute.xlu0 %432
        %434 = vrot.lane.b32.xlu0 %v361, 4
        %v435 = vpop.permute.xlu0 %434
        %436 = vrot.lane.b32.xlu0 %v363, 4
        %v437 = vpop.permute.xlu0 %436
        %438 = vrot.lane.b32.xlu0 %v366, 4
        %v439 = vpop.permute.xlu0 %438
        %440 = vrot.lane.b32.xlu0 %v368, 4
        %v441 = vpop.permute.xlu0 %440
        %442 = vrot.lane.b32.xlu0 %v371, 4
        %v443 = vpop.permute.xlu0 %442
        %444 = vrot.lane.b32.xlu0 %v373, 4
        %v445 = vpop.permute.xlu0 %444
        %446 = vrot.lane.b32.xlu0 %v376, 4
        %v447 = vpop.permute.xlu0 %446
        %448 = vrot.lane.b32.xlu0 %v378, 4
        %v449 = vpop.permute.xlu0 %448
        %450 = vrot.lane.b32.xlu0 %v381, 4
        %v451 = vpop.permute.xlu0 %450
        %452 = vrot.lane.b32.xlu0 %v383, 4
        %v453 = vpop.permute.xlu0 %452
        %454 = vrot.lane.b32.xlu0 %v386, 4
        %v455 = vpop.permute.xlu0 %454
        %456 = vrot.lane.b32.xlu0 %v388, 4
        %v457 = vpop.permute.xlu0 %456
        %458 = vrot.lane.b32.xlu0 %v391, 4
        %v459 = vpop.permute.xlu0 %458
        %460 = vrot.lane.b32.xlu0 %v393, 4
        %v461 = vpop.permute.xlu0 %460
        %462 = vrot.lane.b32.xlu0 %v396, 4
        %v463 = vpop.permute.xlu0 %462
        %464 = vrot.lane.b32.xlu0 %v398, 4
        %v465 = vpop.permute.xlu0 %464
        %466 = vrot.lane.b32.xlu0 %v401, 4
        %v467 = vpop.permute.xlu0 %466
        %468 = vrot.lane.b32.xlu0 %v403, 4
        %v469 = vpop.permute.xlu0 %468
        %470 = vrot.lane.b32.xlu0 %v406, 4
        %v471 = vpop.permute.xlu0 %470
        %472 = vrot.lane.b32.xlu0 %v408, 4
        %v473 = vpop.permute.xlu0 %472
        %474 = vrot.lane.b32.xlu0 %v411, 4
        %v475 = vpop.permute.xlu0 %474
        %476 = vrot.lane.b32.xlu0 %v413, 4
        %v477 = vpop.permute.xlu0 %476
        %vm510 = vcmask 1045504
        %v511 = vrot.slane %v231, 2
        %v512 = vrot.slane %v232, 2
        %v513 = vsel %vm510, %v511, %v512
        %v514 = vrot.slane %v233, 2
        %v515 = vsel %vm510, %v512, %v514
        %v516 = vrot.slane %v234, 2
        %v517 = vrot.slane %v235, 2
        %v518 = vsel %vm510, %v516, %v517
        %v519 = vrot.slane %v236, 2
        %v520 = vsel %vm510, %v517, %v519
        %v521 = vrot.slane %v237, 2
        %v522 = vrot.slane %v238, 2
        %v523 = vsel %vm510, %v521, %v522
        %v524 = vrot.slane %v239, 2
        %v525 = vsel %vm510, %v522, %v524
        %v526 = vrot.slane %v240, 2
        %v527 = vrot.slane %v241, 2
        %v528 = vsel %vm510, %v526, %v527
        %v529 = vrot.slane %v242, 2
        %v530 = vsel %vm510, %v527, %v529
        %v531 = vrot.slane %v243, 2
        %v532 = vrot.slane %v244, 2
        %v533 = vsel %vm510, %v531, %v532
        %v534 = vrot.slane %v245, 2
        %v535 = vsel %vm510, %v532, %v534
        %v536 = vrot.slane %v246, 2
        %v537 = vrot.slane %v247, 2
        %v538 = vsel %vm510, %v536, %v537
        %v539 = vrot.slane %v248, 2
        %v540 = vsel %vm510, %v537, %v539
        %v541 = vrot.slane %v249, 2
        %v542 = vrot.slane %v250, 2
        %v543 = vsel %vm510, %v541, %v542
        %v544 = vrot.slane %v251, 2
        %v545 = vsel %vm510, %v542, %v544
        %v546 = vrot.slane %v252, 2
        %v547 = vrot.slane %v253, 2
        %v548 = vsel %vm510, %v546, %v547
        %v549 = vrot.slane %v254, 2
        %v550 = vsel %vm510, %v547, %v549
        %v551 = vrot.slane %v255, 2
        %v552 = vrot.slane %v256, 2
        %v553 = vsel %vm510, %v551, %v552
        %v554 = vrot.slane %v257, 2
        %v555 = vsel %vm510, %v552, %v554
        %v556 = vrot.slane %v258, 2
        %v557 = vrot.slane %v259, 2
        %v558 = vsel %vm510, %v556, %v557
        %v559 = vrot.slane %v260, 2
        %v560 = vsel %vm510, %v557, %v559
        %v561 = vrot.slane %v261, 2
        %v562 = vrot.slane %v262, 2
        %v563 = vsel %vm510, %v561, %v562
        %v564 = vrot.slane %v263, 2
        %v565 = vsel %vm510, %v562, %v564
        %v566 = vrot.slane %v264, 2
        %v567 = vrot.slane %v265, 2
        %v568 = vsel %vm510, %v566, %v567
        %v569 = vrot.slane %v266, 2
        %v570 = vsel %vm510, %v567, %v569
        %v571 = vrot.slane %v267, 2
        %v572 = vrot.slane %v268, 2
        %v573 = vsel %vm510, %v571, %v572
        %v574 = vrot.slane %v269, 2
        %v575 = vsel %vm510, %v572, %v574
        %v576 = vrot.slane %v270, 2
        %v577 = vrot.slane %v271, 2
        %v578 = vsel %vm510, %v576, %v577
        %v579 = vrot.slane %v272, 2
        %v580 = vsel %vm510, %v577, %v579
        %v581 = vrot.slane %v273, 2
        %v582 = vrot.slane %v274, 2
        %v583 = vsel %vm510, %v581, %v582
        %v584 = vrot.slane %v275, 2
        %v585 = vsel %vm510, %v582, %v584
        %v586 = vrot.slane %v276, 2
        %v587 = vrot.slane %v277, 2
        %v588 = vsel %vm510, %v586, %v587
        %v589 = vrot.slane %v278, 2
        %v590 = vsel %vm510, %v587, %v589
        %591 = vrot.lane.b32.xlu0 %v513, 8
        %v592 = vpop.permute.xlu0 %591
        %593 = vrot.lane.b32.xlu0 %v515, 8
        %v594 = vpop.permute.xlu0 %593
        %595 = vrot.lane.b32.xlu0 %v518, 8
        %v596 = vpop.permute.xlu0 %595
        %597 = vrot.lane.b32.xlu0 %v520, 8
        %v598 = vpop.permute.xlu0 %597
        %599 = vrot.lane.b32.xlu0 %v523, 8
        %v600 = vpop.permute.xlu0 %599
        %601 = vrot.lane.b32.xlu0 %v525, 8
        %v602 = vpop.permute.xlu0 %601
        %603 = vrot.lane.b32.xlu0 %v528, 8
        %v604 = vpop.permute.xlu0 %603
        %605 = vrot.lane.b32.xlu0 %v530, 8
        %v606 = vpop.permute.xlu0 %605
        %607 = vrot.lane.b32.xlu0 %v533, 8
        %v608 = vpop.permute.xlu0 %607
        %609 = vrot.lane.b32.xlu0 %v535, 8
        %v610 = vpop.permute.xlu0 %609
        %611 = vrot.lane.b32.xlu0 %v538, 8
        %v612 = vpop.permute.xlu0 %611
        %613 = vrot.lane.b32.xlu0 %v540, 8
        %v614 = vpop.permute.xlu0 %613
        %615 = vrot.lane.b32.xlu0 %v543, 8
        %v616 = vpop.permute.xlu0 %615
        %617 = vrot.lane.b32.xlu0 %v545, 8
        %v618 = vpop.permute.xlu0 %617
        %619 = vrot.lane.b32.xlu0 %v548, 8
        %v620 = vpop.permute.xlu0 %619
        %621 = vrot.lane.b32.xlu0 %v550, 8
        %v622 = vpop.permute.xlu0 %621
        %623 = vrot.lane.b32.xlu0 %v553, 8
        %v624 = vpop.permute.xlu0 %623
        %625 = vrot.lane.b32.xlu0 %v555, 8
        %v626 = vpop.permute.xlu0 %625
        %627 = vrot.lane.b32.xlu0 %v558, 8
        %v628 = vpop.permute.xlu0 %627
        %629 = vrot.lane.b32.xlu0 %v560, 8
        %v630 = vpop.permute.xlu0 %629
        %631 = vrot.lane.b32.xlu0 %v563, 8
        %v632 = vpop.permute.xlu0 %631
        %633 = vrot.lane.b32.xlu0 %v565, 8
        %v634 = vpop.permute.xlu0 %633
        %635 = vrot.lane.b32.xlu0 %v568, 8
        %v636 = vpop.permute.xlu0 %635
        %637 = vrot.lane.b32.xlu0 %v570, 8
        %v638 = vpop.permute.xlu0 %637
        %639 = vrot.lane.b32.xlu0 %v573, 8
        %v640 = vpop.permute.xlu0 %639
        %641 = vrot.lane.b32.xlu0 %v575, 8
        %v642 = vpop.permute.xlu0 %641
        %643 = vrot.lane.b32.xlu0 %v578, 8
        %v644 = vpop.permute.xlu0 %643
        %645 = vrot.lane.b32.xlu0 %v580, 8
        %v646 = vpop.permute.xlu0 %645
        %647 = vrot.lane.b32.xlu0 %v583, 8
        %v648 = vpop.permute.xlu0 %647
        %649 = vrot.lane.b32.xlu0 %v585, 8
        %v650 = vpop.permute.xlu0 %649
        %651 = vrot.lane.b32.xlu0 %v588, 8
        %v652 = vpop.permute.xlu0 %651
        %653 = vrot.lane.b32.xlu0 %v590, 8
        %v654 = vpop.permute.xlu0 %653
        %689 = vrot.lane.b32.xlu0 %v234, 12
        %v690 = vpop.permute.xlu0 %689
        %691 = vrot.lane.b32.xlu0 %v235, 12
        %v692 = vpop.permute.xlu0 %691
        %693 = vrot.lane.b32.xlu0 %v237, 12
        %v694 = vpop.permute.xlu0 %693
        %695 = vrot.lane.b32.xlu0 %v238, 12
        %v696 = vpop.permute.xlu0 %695
        %697 = vrot.lane.b32.xlu0 %v240, 12
        %v698 = vpop.permute.xlu0 %697
        %699 = vrot.lane.b32.xlu0 %v241, 12
        %v700 = vpop.permute.xlu0 %699
        %701 = vrot.lane.b32.xlu0 %v243, 12
        %v702 = vpop.permute.xlu0 %701
        %703 = vrot.lane.b32.xlu0 %v244, 12
        %v704 = vpop.permute.xlu0 %703
        %705 = vrot.lane.b32.xlu0 %v246, 12
        %v706 = vpop.permute.xlu0 %705
        %707 = vrot.lane.b32.xlu0 %v247, 12
        %v708 = vpop.permute.xlu0 %707
        %709 = vrot.lane.b32.xlu0 %v249, 12
        %v710 = vpop.permute.xlu0 %709
        %711 = vrot.lane.b32.xlu0 %v250, 12
        %v712 = vpop.permute.xlu0 %711
        %713 = vrot.lane.b32.xlu0 %v252, 12
        %v714 = vpop.permute.xlu0 %713
        %715 = vrot.lane.b32.xlu0 %v253, 12
        %v716 = vpop.permute.xlu0 %715
        %717 = vrot.lane.b32.xlu0 %v255, 12
        %v718 = vpop.permute.xlu0 %717
        %719 = vrot.lane.b32.xlu0 %v256, 12
        %v720 = vpop.permute.xlu0 %719
        %721 = vrot.lane.b32.xlu0 %v258, 12
        %v722 = vpop.permute.xlu0 %721
        %723 = vrot.lane.b32.xlu0 %v259, 12
        %v724 = vpop.permute.xlu0 %723
        %725 = vrot.lane.b32.xlu0 %v261, 12
        %v726 = vpop.permute.xlu0 %725
        %727 = vrot.lane.b32.xlu0 %v262, 12
        %v728 = vpop.permute.xlu0 %727
        %729 = vrot.lane.b32.xlu0 %v264, 12
        %v730 = vpop.permute.xlu0 %729
        %731 = vrot.lane.b32.xlu0 %v265, 12
        %v732 = vpop.permute.xlu0 %731
        %733 = vrot.lane.b32.xlu0 %v267, 12
        %v734 = vpop.permute.xlu0 %733
        %735 = vrot.lane.b32.xlu0 %v268, 12
        %v736 = vpop.permute.xlu0 %735
        %737 = vrot.lane.b32.xlu0 %v270, 12
        %v738 = vpop.permute.xlu0 %737
        %739 = vrot.lane.b32.xlu0 %v271, 12
        %v740 = vpop.permute.xlu0 %739
        %741 = vrot.lane.b32.xlu0 %v273, 12
        %v742 = vpop.permute.xlu0 %741
        %743 = vrot.lane.b32.xlu0 %v274, 12
        %v744 = vpop.permute.xlu0 %743
        %745 = vrot.lane.b32.xlu0 %v276, 12
        %v746 = vpop.permute.xlu0 %745
        %747 = vrot.lane.b32.xlu0 %v277, 12
        %v748 = vpop.permute.xlu0 %747
        %749 = vrot.lane.b32.xlu0 %v279, 12
        %v750 = vpop.permute.xlu0 %749
        %751 = vrot.lane.b32.xlu0 %v280, 12
        %v752 = vpop.permute.xlu0 %751
        %v786 = vrot.slane %v279, 1
        %v787 = vrot.slane %v280, 1
        %v788 = vsel %vm333, %v786, %v787
        %v789 = vrot.slane %v281, 1
        %v790 = vsel %vm333, %v787, %v789
        %791 = vrot.lane.b32.xlu0 %v341, 16
        %v792 = vpop.permute.xlu0 %791
        %793 = vrot.lane.b32.xlu0 %v343, 16
        %v794 = vpop.permute.xlu0 %793
        %795 = vrot.lane.b32.xlu0 %v346, 16
        %v796 = vpop.permute.xlu0 %795
        %797 = vrot.lane.b32.xlu0 %v348, 16
        %v798 = vpop.permute.xlu0 %797
        %799 = vrot.lane.b32.xlu0 %v351, 16
        %v800 = vpop.permute.xlu0 %799
        %801 = vrot.lane.b32.xlu0 %v353, 16
        %v802 = vpop.permute.xlu0 %801
        %803 = vrot.lane.b32.xlu0 %v356, 16
        %v804 = vpop.permute.xlu0 %803
        %805 = vrot.lane.b32.xlu0 %v358, 16
        %v806 = vpop.permute.xlu0 %805
        %807 = vrot.lane.b32.xlu0 %v361, 16
        %v808 = vpop.permute.xlu0 %807
        %809 = vrot.lane.b32.xlu0 %v363, 16
        %v810 = vpop.permute.xlu0 %809
        %811 = vrot.lane.b32.xlu0 %v366, 16
        %v812 = vpop.permute.xlu0 %811
        %813 = vrot.lane.b32.xlu0 %v368, 16
        %v814 = vpop.permute.xlu0 %813
        %815 = vrot.lane.b32.xlu0 %v371, 16
        %v816 = vpop.permute.xlu0 %815
        %817 = vrot.lane.b32.xlu0 %v373, 16
        %v818 = vpop.permute.xlu0 %817
        %819 = vrot.lane.b32.xlu0 %v376, 16
        %v820 = vpop.permute.xlu0 %819
        %821 = vrot.lane.b32.xlu0 %v378, 16
        %v822 = vpop.permute.xlu0 %821
        %823 = vrot.lane.b32.xlu0 %v381, 16
        %v824 = vpop.permute.xlu0 %823
        %825 = vrot.lane.b32.xlu0 %v383, 16
        %v826 = vpop.permute.xlu0 %825
        %827 = vrot.lane.b32.xlu0 %v386, 16
        %v828 = vpop.permute.xlu0 %827
        %829 = vrot.lane.b32.xlu0 %v388, 16
        %v830 = vpop.permute.xlu0 %829
        %831 = vrot.lane.b32.xlu0 %v391, 16
        %v832 = vpop.permute.xlu0 %831
        %833 = vrot.lane.b32.xlu0 %v393, 16
        %v834 = vpop.permute.xlu0 %833
        %835 = vrot.lane.b32.xlu0 %v396, 16
        %v836 = vpop.permute.xlu0 %835
        %837 = vrot.lane.b32.xlu0 %v398, 16
        %v838 = vpop.permute.xlu0 %837
        %839 = vrot.lane.b32.xlu0 %v401, 16
        %v840 = vpop.permute.xlu0 %839
        %841 = vrot.lane.b32.xlu0 %v403, 16
        %v842 = vpop.permute.xlu0 %841
        %843 = vrot.lane.b32.xlu0 %v406, 16
        %v844 = vpop.permute.xlu0 %843
        %845 = vrot.lane.b32.xlu0 %v408, 16
        %v846 = vpop.permute.xlu0 %845
        %847 = vrot.lane.b32.xlu0 %v411, 16
        %v848 = vpop.permute.xlu0 %847
        %849 = vrot.lane.b32.xlu0 %v413, 16
        %v850 = vpop.permute.xlu0 %849
        %851 = vrot.lane.b32.xlu0 %v788, 16
        %v852 = vpop.permute.xlu0 %851
        %853 = vrot.lane.b32.xlu0 %v790, 16
        %v854 = vpop.permute.xlu0 %853
        %v887 = vrot.slane %v279, 2
        %v888 = vrot.slane %v280, 2
        %v889 = vsel %vm510, %v887, %v888
        %v890 = vrot.slane %v281, 2
        %v891 = vsel %vm510, %v888, %v890
        %892 = vrot.lane.b32.xlu0 %v518, 20
        %v893 = vpop.permute.xlu0 %892
        %894 = vrot.lane.b32.xlu0 %v520, 20
        %v895 = vpop.permute.xlu0 %894
        %896 = vrot.lane.b32.xlu0 %v523, 20
        %v897 = vpop.permute.xlu0 %896
        %898 = vrot.lane.b32.xlu0 %v525, 20
        %v899 = vpop.permute.xlu0 %898
        %900 = vrot.lane.b32.xlu0 %v528, 20
        %v901 = vpop.permute.xlu0 %900
        %902 = vrot.lane.b32.xlu0 %v530, 20
        %v903 = vpop.permute.xlu0 %902
        %904 = vrot.lane.b32.xlu0 %v533, 20
        %v905 = vpop.permute.xlu0 %904
        %906 = vrot.lane.b32.xlu0 %v535, 20
        %v907 = vpop.permute.xlu0 %906
        %908 = vrot.lane.b32.xlu0 %v538, 20
        %v909 = vpop.permute.xlu0 %908
        %910 = vrot.lane.b32.xlu0 %v540, 20
        %v911 = vpop.permute.xlu0 %910
        %912 = vrot.lane.b32.xlu0 %v543, 20
        %v913 = vpop.permute.xlu0 %912
        %914 = vrot.lane.b32.xlu0 %v545, 20
        %v915 = vpop.permute.xlu0 %914
        %916 = vrot.lane.b32.xlu0 %v548, 20
        %v917 = vpop.permute.xlu0 %916
        %918 = vrot.lane.b32.xlu0 %v550, 20
        %v919 = vpop.permute.xlu0 %918
        %920 = vrot.lane.b32.xlu0 %v553, 20
        %v921 = vpop.permute.xlu0 %920
        %922 = vrot.lane.b32.xlu0 %v555, 20
        %v923 = vpop.permute.xlu0 %922
        %924 = vrot.lane.b32.xlu0 %v558, 20
        %v925 = vpop.permute.xlu0 %924
        %926 = vrot.lane.b32.xlu0 %v560, 20
        %v927 = vpop.permute.xlu0 %926
        %928 = vrot.lane.b32.xlu0 %v563, 20
        %v929 = vpop.permute.xlu0 %928
        %930 = vrot.lane.b32.xlu0 %v565, 20
        %v931 = vpop.permute.xlu0 %930
        %932 = vrot.lane.b32.xlu0 %v568, 20
        %v933 = vpop.permute.xlu0 %932
        %934 = vrot.lane.b32.xlu0 %v570, 20
        %v935 = vpop.permute.xlu0 %934
        %936 = vrot.lane.b32.xlu0 %v573, 20
        %v937 = vpop.permute.xlu0 %936
        %938 = vrot.lane.b32.xlu0 %v575, 20
        %v939 = vpop.permute.xlu0 %938
        %940 = vrot.lane.b32.xlu0 %v578, 20
        %v941 = vpop.permute.xlu0 %940
        %942 = vrot.lane.b32.xlu0 %v580, 20
        %v943 = vpop.permute.xlu0 %942
        %944 = vrot.lane.b32.xlu0 %v583, 20
        %v945 = vpop.permute.xlu0 %944
        %946 = vrot.lane.b32.xlu0 %v585, 20
        %v947 = vpop.permute.xlu0 %946
        %948 = vrot.lane.b32.xlu0 %v588, 20
        %v949 = vpop.permute.xlu0 %948
        %950 = vrot.lane.b32.xlu0 %v590, 20
        %v951 = vpop.permute.xlu0 %950
        %952 = vrot.lane.b32.xlu0 %v889, 20
        %v953 = vpop.permute.xlu0 %952
        %954 = vrot.lane.b32.xlu0 %v891, 20
        %v955 = vpop.permute.xlu0 %954
        %990 = vrot.lane.b32.xlu0 %v237, 24
        %v991 = vpop.permute.xlu0 %990
        %992 = vrot.lane.b32.xlu0 %v238, 24
        %v993 = vpop.permute.xlu0 %992
        %994 = vrot.lane.b32.xlu0 %v240, 24
        %v995 = vpop.permute.xlu0 %994
        %996 = vrot.lane.b32.xlu0 %v241, 24
        %v997 = vpop.permute.xlu0 %996
        %998 = vrot.lane.b32.xlu0 %v243, 24
        %v999 = vpop.permute.xlu0 %998
        %1000 = vrot.lane.b32.xlu0 %v244, 24
        %v1001 = vpop.permute.xlu0 %1000
        %1002 = vrot.lane.b32.xlu0 %v246, 24
        %v1003 = vpop.permute.xlu0 %1002
        %1004 = vrot.lane.b32.xlu0 %v247, 24
        %v1005 = vpop.permute.xlu0 %1004
        %1006 = vrot.lane.b32.xlu0 %v249, 24
        %v1007 = vpop.permute.xlu0 %1006
        %1008 = vrot.lane.b32.xlu0 %v250, 24
        %v1009 = vpop.permute.xlu0 %1008
        %1010 = vrot.lane.b32.xlu0 %v252, 24
        %v1011 = vpop.permute.xlu0 %1010
        %1012 = vrot.lane.b32.xlu0 %v253, 24
        %v1013 = vpop.permute.xlu0 %1012
        %1014 = vrot.lane.b32.xlu0 %v255, 24
        %v1015 = vpop.permute.xlu0 %1014
        %1016 = vrot.lane.b32.xlu0 %v256, 24
        %v1017 = vpop.permute.xlu0 %1016
        %1018 = vrot.lane.b32.xlu0 %v258, 24
        %v1019 = vpop.permute.xlu0 %1018
        %1020 = vrot.lane.b32.xlu0 %v259, 24
        %v1021 = vpop.permute.xlu0 %1020
        %1022 = vrot.lane.b32.xlu0 %v261, 24
        %v1023 = vpop.permute.xlu0 %1022
        %1024 = vrot.lane.b32.xlu0 %v262, 24
        %v1025 = vpop.permute.xlu0 %1024
        %1026 = vrot.lane.b32.xlu0 %v264, 24
        %v1027 = vpop.permute.xlu0 %1026
        %1028 = vrot.lane.b32.xlu0 %v265, 24
        %v1029 = vpop.permute.xlu0 %1028
        %1030 = vrot.lane.b32.xlu0 %v267, 24
        %v1031 = vpop.permute.xlu0 %1030
        %1032 = vrot.lane.b32.xlu0 %v268, 24
        %v1033 = vpop.permute.xlu0 %1032
        %1034 = vrot.lane.b32.xlu0 %v270, 24
        %v1035 = vpop.permute.xlu0 %1034
        %1036 = vrot.lane.b32.xlu0 %v271, 24
        %v1037 = vpop.permute.xlu0 %1036
        %1038 = vrot.lane.b32.xlu0 %v273, 24
        %v1039 = vpop.permute.xlu0 %1038
        %1040 = vrot.lane.b32.xlu0 %v274, 24
        %v1041 = vpop.permute.xlu0 %1040
        %1042 = vrot.lane.b32.xlu0 %v276, 24
        %v1043 = vpop.permute.xlu0 %1042
        %1044 = vrot.lane.b32.xlu0 %v277, 24
        %v1045 = vpop.permute.xlu0 %1044
        %1046 = vrot.lane.b32.xlu0 %v279, 24
        %v1047 = vpop.permute.xlu0 %1046
        %1048 = vrot.lane.b32.xlu0 %v280, 24
        %v1049 = vpop.permute.xlu0 %1048
        %1050 = vrot.lane.b32.xlu0 %v282, 24
        %v1051 = vpop.permute.xlu0 %1050
        %1052 = vrot.lane.b32.xlu0 %v283, 24
        %v1053 = vpop.permute.xlu0 %1052
        %v1087 = vrot.slane %v282, 1
        %v1088 = vrot.slane %v283, 1
        %v1089 = vsel %vm333, %v1087, %v1088
        %v1090 = vrot.slane %v284, 1
        %v1091 = vsel %vm333, %v1088, %v1090
        %1092 = vrot.lane.b32.xlu0 %v346, 28
        %v1093 = vpop.permute.xlu0 %1092
        %1094 = vrot.lane.b32.xlu0 %v348, 28
        %v1095 = vpop.permute.xlu0 %1094
        %1096 = vrot.lane.b32.xlu0 %v351, 28
        %v1097 = vpop.permute.xlu0 %1096
        %1098 = vrot.lane.b32.xlu0 %v353, 28
        %v1099 = vpop.permute.xlu0 %1098
        %1100 = vrot.lane.b32.xlu0 %v356, 28
        %v1101 = vpop.permute.xlu0 %1100
        %1102 = vrot.lane.b32.xlu0 %v358, 28
        %v1103 = vpop.permute.xlu0 %1102
        %1104 = vrot.lane.b32.xlu0 %v361, 28
        %v1105 = vpop.permute.xlu0 %1104
        %1106 = vrot.lane.b32.xlu0 %v363, 28
        %v1107 = vpop.permute.xlu0 %1106
        %1108 = vrot.lane.b32.xlu0 %v366, 28
        %v1109 = vpop.permute.xlu0 %1108
        %1110 = vrot.lane.b32.xlu0 %v368, 28
        %v1111 = vpop.permute.xlu0 %1110
        %1112 = vrot.lane.b32.xlu0 %v371, 28
        %v1113 = vpop.permute.xlu0 %1112
        %1114 = vrot.lane.b32.xlu0 %v373, 28
        %v1115 = vpop.permute.xlu0 %1114
        %1116 = vrot.lane.b32.xlu0 %v376, 28
        %v1117 = vpop.permute.xlu0 %1116
        %1118 = vrot.lane.b32.xlu0 %v378, 28
        %v1119 = vpop.permute.xlu0 %1118
        %1120 = vrot.lane.b32.xlu0 %v381, 28
        %v1121 = vpop.permute.xlu0 %1120
        %1122 = vrot.lane.b32.xlu0 %v383, 28
        %v1123 = vpop.permute.xlu0 %1122
        %1124 = vrot.lane.b32.xlu0 %v386, 28
        %v1125 = vpop.permute.xlu0 %1124
        %1126 = vrot.lane.b32.xlu0 %v388, 28
        %v1127 = vpop.permute.xlu0 %1126
        %1128 = vrot.lane.b32.xlu0 %v391, 28
        %v1129 = vpop.permute.xlu0 %1128
        %1130 = vrot.lane.b32.xlu0 %v393, 28
        %v1131 = vpop.permute.xlu0 %1130
        %1132 = vrot.lane.b32.xlu0 %v396, 28
        %v1133 = vpop.permute.xlu0 %1132
        %1134 = vrot.lane.b32.xlu0 %v398, 28
        %v1135 = vpop.permute.xlu0 %1134
        %1136 = vrot.lane.b32.xlu0 %v401, 28
        %v1137 = vpop.permute.xlu0 %1136
        %1138 = vrot.lane.b32.xlu0 %v403, 28
        %v1139 = vpop.permute.xlu0 %1138
        %1140 = vrot.lane.b32.xlu0 %v406, 28
        %v1141 = vpop.permute.xlu0 %1140
        %1142 = vrot.lane.b32.xlu0 %v408, 28
        %v1143 = vpop.permute.xlu0 %1142
        %1144 = vrot.lane.b32.xlu0 %v411, 28
        %v1145 = vpop.permute.xlu0 %1144
        %1146 = vrot.lane.b32.xlu0 %v413, 28
        %v1147 = vpop.permute.xlu0 %1146
        %1148 = vrot.lane.b32.xlu0 %v788, 28
        %v1149 = vpop.permute.xlu0 %1148
        %1150 = vrot.lane.b32.xlu0 %v790, 28
        %v1151 = vpop.permute.xlu0 %1150
        %1152 = vrot.lane.b32.xlu0 %v1089, 28
        %v1153 = vpop.permute.xlu0 %1152
        %1154 = vrot.lane.b32.xlu0 %v1091, 28
        %v1155 = vpop.permute.xlu0 %1154
        %v1188 = vrot.slane %v282, 2
        %v1189 = vrot.slane %v283, 2
        %v1190 = vsel %vm510, %v1188, %v1189
        %v1191 = vrot.slane %v284, 2
        %v1192 = vsel %vm510, %v1189, %v1191
        %1193 = vrot.lane.b32.xlu0 %v523, 32
        %v1194 = vpop.permute.xlu0 %1193
        %1195 = vrot.lane.b32.xlu0 %v525, 32
        %v1196 = vpop.permute.xlu0 %1195
        %1197 = vrot.lane.b32.xlu0 %v528, 32
        %v1198 = vpop.permute.xlu0 %1197
        %1199 = vrot.lane.b32.xlu0 %v530, 32
        %v1200 = vpop.permute.xlu0 %1199
        %1201 = vrot.lane.b32.xlu0 %v533, 32
        %v1202 = vpop.permute.xlu0 %1201
        %1203 = vrot.lane.b32.xlu0 %v535, 32
        %v1204 = vpop.permute.xlu0 %1203
        %1205 = vrot.lane.b32.xlu0 %v538, 32
        %v1206 = vpop.permute.xlu0 %1205
        %1207 = vrot.lane.b32.xlu0 %v540, 32
        %v1208 = vpop.permute.xlu0 %1207
        %1209 = vrot.lane.b32.xlu0 %v543, 32
        %v1210 = vpop.permute.xlu0 %1209
        %1211 = vrot.lane.b32.xlu0 %v545, 32
        %v1212 = vpop.permute.xlu0 %1211
        %1213 = vrot.lane.b32.xlu0 %v548, 32
        %v1214 = vpop.permute.xlu0 %1213
        %1215 = vrot.lane.b32.xlu0 %v550, 32
        %v1216 = vpop.permute.xlu0 %1215
        %1217 = vrot.lane.b32.xlu0 %v553, 32
        %v1218 = vpop.permute.xlu0 %1217
        %1219 = vrot.lane.b32.xlu0 %v555, 32
        %v1220 = vpop.permute.xlu0 %1219
        %1221 = vrot.lane.b32.xlu0 %v558, 32
        %v1222 = vpop.permute.xlu0 %1221
        %1223 = vrot.lane.b32.xlu0 %v560, 32
        %v1224 = vpop.permute.xlu0 %1223
        %1225 = vrot.lane.b32.xlu0 %v563, 32
        %v1226 = vpop.permute.xlu0 %1225
        %1227 = vrot.lane.b32.xlu0 %v565, 32
        %v1228 = vpop.permute.xlu0 %1227
        %1229 = vrot.lane.b32.xlu0 %v568, 32
        %v1230 = vpop.permute.xlu0 %1229
        %1231 = vrot.lane.b32.xlu0 %v570, 32
        %v1232 = vpop.permute.xlu0 %1231
        %1233 = vrot.lane.b32.xlu0 %v573, 32
        %v1234 = vpop.permute.xlu0 %1233
        %1235 = vrot.lane.b32.xlu0 %v575, 32
        %v1236 = vpop.permute.xlu0 %1235
        %1237 = vrot.lane.b32.xlu0 %v578, 32
        %v1238 = vpop.permute.xlu0 %1237
        %1239 = vrot.lane.b32.xlu0 %v580, 32
        %v1240 = vpop.permute.xlu0 %1239
        %1241 = vrot.lane.b32.xlu0 %v583, 32
        %v1242 = vpop.permute.xlu0 %1241
        %1243 = vrot.lane.b32.xlu0 %v585, 32
        %v1244 = vpop.permute.xlu0 %1243
        %1245 = vrot.lane.b32.xlu0 %v588, 32
        %v1246 = vpop.permute.xlu0 %1245
        %1247 = vrot.lane.b32.xlu0 %v590, 32
        %v1248 = vpop.permute.xlu0 %1247
        %1249 = vrot.lane.b32.xlu0 %v889, 32
        %v1250 = vpop.permute.xlu0 %1249
        %1251 = vrot.lane.b32.xlu0 %v891, 32
        %v1252 = vpop.permute.xlu0 %1251
        %1253 = vrot.lane.b32.xlu0 %v1190, 32
        %v1254 = vpop.permute.xlu0 %1253
        %1255 = vrot.lane.b32.xlu0 %v1192, 32
        %v1256 = vpop.permute.xlu0 %1255
        %vm1289 = vcmask 31744
        %v1290 = vsel %vm1289, %v231, %v415
        %v1291 = vsel %vm1289, %v232, %v417
        %v1292 = vsel %vm1289, %v234, %v419
        %v1293 = vsel %vm1289, %v235, %v421
        %v1294 = vsel %vm1289, %v237, %v423
        %v1295 = vsel %vm1289, %v238, %v425
        %v1296 = vsel %vm1289, %v240, %v427
        %v1297 = vsel %vm1289, %v241, %v429
        %v1298 = vsel %vm1289, %v243, %v431
        %v1299 = vsel %vm1289, %v244, %v433
        %v1300 = vsel %vm1289, %v246, %v435
        %v1301 = vsel %vm1289, %v247, %v437
        %v1302 = vsel %vm1289, %v249, %v439
        %v1303 = vsel %vm1289, %v250, %v441
        %v1304 = vsel %vm1289, %v252, %v443
        %v1305 = vsel %vm1289, %v253, %v445
        %v1306 = vsel %vm1289, %v255, %v447
        %v1307 = vsel %vm1289, %v256, %v449
        %v1308 = vsel %vm1289, %v258, %v451
        %v1309 = vsel %vm1289, %v259, %v453
        %v1310 = vsel %vm1289, %v261, %v455
        %v1311 = vsel %vm1289, %v262, %v457
        %v1312 = vsel %vm1289, %v264, %v459
        %v1313 = vsel %vm1289, %v265, %v461
        %v1314 = vsel %vm1289, %v267, %v463
        %v1315 = vsel %vm1289, %v268, %v465
        %v1316 = vsel %vm1289, %v270, %v467
        %v1317 = vsel %vm1289, %v271, %v469
        %v1318 = vsel %vm1289, %v273, %v471
        %v1319 = vsel %vm1289, %v274, %v473
        %v1320 = vsel %vm1289, %v276, %v475
        %v1321 = vsel %vm1289, %v277, %v477
        %vm1322 = vcmask 64512
        %v1323 = vsel %vm1322, %v1290, %v592
        %v1324 = vsel %vm1322, %v1291, %v594
        %v1325 = vsel %vm1322, %v1292, %v596
        %v1326 = vsel %vm1322, %v1293, %v598
        %v1327 = vsel %vm1322, %v1294, %v600
        %v1328 = vsel %vm1322, %v1295, %v602
        %v1329 = vsel %vm1322, %v1296, %v604
        %v1330 = vsel %vm1322, %v1297, %v606
        %v1331 = vsel %vm1322, %v1298, %v608
        %v1332 = vsel %vm1322, %v1299, %v610
        %v1333 = vsel %vm1322, %v1300, %v612
        %v1334 = vsel %vm1322, %v1301, %v614
        %v1335 = vsel %vm1322, %v1302, %v616
        %v1336 = vsel %vm1322, %v1303, %v618
        %v1337 = vsel %vm1322, %v1304, %v620
        %v1338 = vsel %vm1322, %v1305, %v622
        %v1339 = vsel %vm1322, %v1306, %v624
        %v1340 = vsel %vm1322, %v1307, %v626
        %v1341 = vsel %vm1322, %v1308, %v628
        %v1342 = vsel %vm1322, %v1309, %v630
        %v1343 = vsel %vm1322, %v1310, %v632
        %v1344 = vsel %vm1322, %v1311, %v634
        %v1345 = vsel %vm1322, %v1312, %v636
        %v1346 = vsel %vm1322, %v1313, %v638
        %v1347 = vsel %vm1322, %v1314, %v640
        %v1348 = vsel %vm1322, %v1315, %v642
        %v1349 = vsel %vm1322, %v1316, %v644
        %v1350 = vsel %vm1322, %v1317, %v646
        %v1351 = vsel %vm1322, %v1318, %v648
        %v1352 = vsel %vm1322, %v1319, %v650
        %v1353 = vsel %vm1322, %v1320, %v652
        %v1354 = vsel %vm1322, %v1321, %v654
        %vm1355 = vcmask 97280
        %v1356 = vsel %vm1355, %v1323, %v690
        %v1357 = vsel %vm1355, %v1324, %v692
        %v1358 = vsel %vm1355, %v1325, %v694
        %v1359 = vsel %vm1355, %v1326, %v696
        %v1360 = vsel %vm1355, %v1327, %v698
        %v1361 = vsel %vm1355, %v1328, %v700
        %v1362 = vsel %vm1355, %v1329, %v702
        %v1363 = vsel %vm1355, %v1330, %v704
        %v1364 = vsel %vm1355, %v1331, %v706
        %v1365 = vsel %vm1355, %v1332, %v708
        %v1366 = vsel %vm1355, %v1333, %v710
        %v1367 = vsel %vm1355, %v1334, %v712
        %v1368 = vsel %vm1355, %v1335, %v714
        %v1369 = vsel %vm1355, %v1336, %v716
        %v1370 = vsel %vm1355, %v1337, %v718
        %v1371 = vsel %vm1355, %v1338, %v720
        %v1372 = vsel %vm1355, %v1339, %v722
        %v1373 = vsel %vm1355, %v1340, %v724
        %v1374 = vsel %vm1355, %v1341, %v726
        %v1375 = vsel %vm1355, %v1342, %v728
        %v1376 = vsel %vm1355, %v1343, %v730
        %v1377 = vsel %vm1355, %v1344, %v732
        %v1378 = vsel %vm1355, %v1345, %v734
        %v1379 = vsel %vm1355, %v1346, %v736
        %v1380 = vsel %vm1355, %v1347, %v738
        %v1381 = vsel %vm1355, %v1348, %v740
        %v1382 = vsel %vm1355, %v1349, %v742
        %v1383 = vsel %vm1355, %v1350, %v744
        %v1384 = vsel %vm1355, %v1351, %v746
        %v1385 = vsel %vm1355, %v1352, %v748
        %v1386 = vsel %vm1355, %v1353, %v750
        %v1387 = vsel %vm1355, %v1354, %v752
        %vm1388 = vcmask 130048
        %v1389 = vsel %vm1388, %v1356, %v792
        %v1390 = vsel %vm1388, %v1357, %v794
        %v1391 = vsel %vm1388, %v1358, %v796
        %v1392 = vsel %vm1388, %v1359, %v798
        %v1393 = vsel %vm1388, %v1360, %v800
        %v1394 = vsel %vm1388, %v1361, %v802
        %v1395 = vsel %vm1388, %v1362, %v804
        %v1396 = vsel %vm1388, %v1363, %v806
        %v1397 = vsel %vm1388, %v1364, %v808
        %v1398 = vsel %vm1388, %v1365, %v810
        %v1399 = vsel %vm1388, %v1366, %v812
        %v1400 = vsel %vm1388, %v1367, %v814
        %v1401 = vsel %vm1388, %v1368, %v816
        %v1402 = vsel %vm1388, %v1369, %v818
        %v1403 = vsel %vm1388, %v1370, %v820
        %v1404 = vsel %vm1388, %v1371, %v822
        %v1405 = vsel %vm1388, %v1372, %v824
        %v1406 = vsel %vm1388, %v1373, %v826
        %v1407 = vsel %vm1388, %v1374, %v828
        %v1408 = vsel %vm1388, %v1375, %v830
        %v1409 = vsel %vm1388, %v1376, %v832
        %v1410 = vsel %vm1388, %v1377, %v834
        %v1411 = vsel %vm1388, %v1378, %v836
        %v1412 = vsel %vm1388, %v1379, %v838
        %v1413 = vsel %vm1388, %v1380, %v840
        %v1414 = vsel %vm1388, %v1381, %v842
        %v1415 = vsel %vm1388, %v1382, %v844
        %v1416 = vsel %vm1388, %v1383, %v846
        %v1417 = vsel %vm1388, %v1384, %v848
        %v1418 = vsel %vm1388, %v1385, %v850
        %v1419 = vsel %vm1388, %v1386, %v852
        %v1420 = vsel %vm1388, %v1387, %v854
        %vm1421 = vcmask 162816
        %v1422 = vsel %vm1421, %v1389, %v893
        %v1423 = vsel %vm1421, %v1390, %v895
        %v1424 = vsel %vm1421, %v1391, %v897
        %v1425 = vsel %vm1421, %v1392, %v899
        %v1426 = vsel %vm1421, %v1393, %v901
        %v1427 = vsel %vm1421, %v1394, %v903
        %v1428 = vsel %vm1421, %v1395, %v905
        %v1429 = vsel %vm1421, %v1396, %v907
        %v1430 = vsel %vm1421, %v1397, %v909
        %v1431 = vsel %vm1421, %v1398, %v911
        %v1432 = vsel %vm1421, %v1399, %v913
        %v1433 = vsel %vm1421, %v1400, %v915
        %v1434 = vsel %vm1421, %v1401, %v917
        %v1435 = vsel %vm1421, %v1402, %v919
        %v1436 = vsel %vm1421, %v1403, %v921
        %v1437 = vsel %vm1421, %v1404, %v923
        %v1438 = vsel %vm1421, %v1405, %v925
        %v1439 = vsel %vm1421, %v1406, %v927
        %v1440 = vsel %vm1421, %v1407, %v929
        %v1441 = vsel %vm1421, %v1408, %v931
        %v1442 = vsel %vm1421, %v1409, %v933
        %v1443 = vsel %vm1421, %v1410, %v935
        %v1444 = vsel %vm1421, %v1411, %v937
        %v1445 = vsel %vm1421, %v1412, %v939
        %v1446 = vsel %vm1421, %v1413, %v941
        %v1447 = vsel %vm1421, %v1414, %v943
        %v1448 = vsel %vm1421, %v1415, %v945
        %v1449 = vsel %vm1421, %v1416, %v947
        %v1450 = vsel %vm1421, %v1417, %v949
        %v1451 = vsel %vm1421, %v1418, %v951
        %v1452 = vsel %vm1421, %v1419, %v953
        %v1453 = vsel %vm1421, %v1420, %v955
        %vm1454 = vcmask 195584
        %v1455 = vsel %vm1454, %v1422, %v991
        %v1456 = vsel %vm1454, %v1423, %v993
        %v1457 = vsel %vm1454, %v1424, %v995
        %v1458 = vsel %vm1454, %v1425, %v997
        %v1459 = vsel %vm1454, %v1426, %v999
        %v1460 = vsel %vm1454, %v1427, %v1001
        %v1461 = vsel %vm1454, %v1428, %v1003
        %v1462 = vsel %vm1454, %v1429, %v1005
        %v1463 = vsel %vm1454, %v1430, %v1007
        %v1464 = vsel %vm1454, %v1431, %v1009
        %v1465 = vsel %vm1454, %v1432, %v1011
        %v1466 = vsel %vm1454, %v1433, %v1013
        %v1467 = vsel %vm1454, %v1434, %v1015
        %v1468 = vsel %vm1454, %v1435, %v1017
        %v1469 = vsel %vm1454, %v1436, %v1019
        %v1470 = vsel %vm1454, %v1437, %v1021
        %v1471 = vsel %vm1454, %v1438, %v1023
        %v1472 = vsel %vm1454, %v1439, %v1025
        %v1473 = vsel %vm1454, %v1440, %v1027
        %v1474 = vsel %vm1454, %v1441, %v1029
        %v1475 = vsel %vm1454, %v1442, %v1031
        %v1476 = vsel %vm1454, %v1443, %v1033
        %v1477 = vsel %vm1454, %v1444, %v1035
        %v1478 = vsel %vm1454, %v1445, %v1037
        %v1479 = vsel %vm1454, %v1446, %v1039
        %v1480 = vsel %vm1454, %v1447, %v1041
        %v1481 = vsel %vm1454, %v1448, %v1043
        %v1482 = vsel %vm1454, %v1449, %v1045
        %v1483 = vsel %vm1454, %v1450, %v1047
        %v1484 = vsel %vm1454, %v1451, %v1049
        %v1485 = vsel %vm1454, %v1452, %v1051
        %v1486 = vsel %vm1454, %v1453, %v1053
        %vm1487 = vcmask 228352
        %v1488 = vsel %vm1487, %v1455, %v1093
        %v1489 = vsel %vm1487, %v1456, %v1095
        %v1490 = vsel %vm1487, %v1457, %v1097
        %v1491 = vsel %vm1487, %v1458, %v1099
        %v1492 = vsel %vm1487, %v1459, %v1101
        %v1493 = vsel %vm1487, %v1460, %v1103
        %v1494 = vsel %vm1487, %v1461, %v1105
        %v1495 = vsel %vm1487, %v1462, %v1107
        %v1496 = vsel %vm1487, %v1463, %v1109
        %v1497 = vsel %vm1487, %v1464, %v1111
        %v1498 = vsel %vm1487, %v1465, %v1113
        %v1499 = vsel %vm1487, %v1466, %v1115
        %v1500 = vsel %vm1487, %v1467, %v1117
        %v1501 = vsel %vm1487, %v1468, %v1119
        %v1502 = vsel %vm1487, %v1469, %v1121
        %v1503 = vsel %vm1487, %v1470, %v1123
        %v1504 = vsel %vm1487, %v1471, %v1125
        %v1505 = vsel %vm1487, %v1472, %v1127
        %v1506 = vsel %vm1487, %v1473, %v1129
        %v1507 = vsel %vm1487, %v1474, %v1131
        %v1508 = vsel %vm1487, %v1475, %v1133
        %v1509 = vsel %vm1487, %v1476, %v1135
        %v1510 = vsel %vm1487, %v1477, %v1137
        %v1511 = vsel %vm1487, %v1478, %v1139
        %v1512 = vsel %vm1487, %v1479, %v1141
        %v1513 = vsel %vm1487, %v1480, %v1143
        %v1514 = vsel %vm1487, %v1481, %v1145
        %v1515 = vsel %vm1487, %v1482, %v1147
        %v1516 = vsel %vm1487, %v1483, %v1149
        %v1517 = vsel %vm1487, %v1484, %v1151
        %v1518 = vsel %vm1487, %v1485, %v1153
        %v1519 = vsel %vm1487, %v1486, %v1155
        %vm1520 = vcmask 261120
        %v1521 = vsel %vm1520, %v1488, %v1194
        %v1522 = vsel %vm1520, %v1489, %v1196
        %v1523 = vsel %vm1520, %v1490, %v1198
        %v1524 = vsel %vm1520, %v1491, %v1200
        %v1525 = vsel %vm1520, %v1492, %v1202
        %v1526 = vsel %vm1520, %v1493, %v1204
        %v1527 = vsel %vm1520, %v1494, %v1206
        %v1528 = vsel %vm1520, %v1495, %v1208
        %v1529 = vsel %vm1520, %v1496, %v1210
        %v1530 = vsel %vm1520, %v1497, %v1212
        %v1531 = vsel %vm1520, %v1498, %v1214
        %v1532 = vsel %vm1520, %v1499, %v1216
        %v1533 = vsel %vm1520, %v1500, %v1218
        %v1534 = vsel %vm1520, %v1501, %v1220
        %v1535 = vsel %vm1520, %v1502, %v1222
        %v1536 = vsel %vm1520, %v1503, %v1224
        %v1537 = vsel %vm1520, %v1504, %v1226
        %v1538 = vsel %vm1520, %v1505, %v1228
        %v1539 = vsel %vm1520, %v1506, %v1230
        %v1540 = vsel %vm1520, %v1507, %v1232
        %v1541 = vsel %vm1520, %v1508, %v1234
        %v1542 = vsel %vm1520, %v1509, %v1236
        %v1543 = vsel %vm1520, %v1510, %v1238
        %v1544 = vsel %vm1520, %v1511, %v1240
        %v1545 = vsel %vm1520, %v1512, %v1242
        %v1546 = vsel %vm1520, %v1513, %v1244
        %v1547 = vsel %vm1520, %v1514, %v1246
        %v1548 = vsel %vm1520, %v1515, %v1248
        %v1549 = vsel %vm1520, %v1516, %v1250
        %v1550 = vsel %vm1520, %v1517, %v1252
        %v1551 = vsel %vm1520, %v1518, %v1254
        %v1552 = vsel %vm1520, %v1519, %v1256
        %v1553 = vpack.c.bf16 %v1522, %v1521
        %v1554 = vpack.c.bf16 %v1524, %v1523
        %v1555 = vpack.c.bf16 %v1526, %v1525
        %v1556 = vpack.c.bf16 %v1528, %v1527
        %v1557 = vpack.c.bf16 %v1530, %v1529
        %v1558 = vpack.c.bf16 %v1532, %v1531
        %v1559 = vpack.c.bf16 %v1534, %v1533
        %v1560 = vpack.c.bf16 %v1536, %v1535
        %v1561 = vpack.c.bf16 %v1538, %v1537
        %v1562 = vpack.c.bf16 %v1540, %v1539
        %v1563 = vpack.c.bf16 %v1542, %v1541
        %v1564 = vpack.c.bf16 %v1544, %v1543
        %v1565 = vpack.c.bf16 %v1546, %v1545
        %v1566 = vpack.c.bf16 %v1548, %v1547
        %v1567 = vpack.c.bf16 %v1550, %v1549
        %v1568 = vpack.c.bf16 %v1552, %v1551
        %v1569 = vld [vmem:[%s1] sm:$0xf]
        %v1570 = vld [vmem:[%s1 + $0x4] sm:$0xf]
        %v1571 = vld [vmem:[%s1 + $0x8] sm:$0xf]
        %v1572 = vld [vmem:[%s1 + $0xc] sm:$0xf]
        %v1573 = vld [vmem:[%s1 + $0x10] sm:$0x3]
        %v1579 = vunpack.c.l.b16 %v1569
        %v1580 = vunpack.c.l.b16 %v1570
        %v1581 = vunpack.c.l.b16 %v1571
        %v1582 = vunpack.c.l.b16 %v1572
        %v1583 = vunpack.c.l.b16 %v1573
        %v1584 = vpack.c.b16 %v1580, %v1579
        %v1585 = vpack.c.b16 %v1582, %v1581
        %v1586 = vpack.c.b16 %v1583, %v1583
        %vm1589 = vcmask 293888
        %v1591 = vsel %vm1589, %v1553, 0
        %v1594 = vsel %vm1589, %v1554, 0
        %v1597 = vsel %vm1589, %v1555, 0
        %v1600 = vsel %vm1589, %v1556, 0
        %v1603 = vsel %vm1589, %v1557, 0
        %v1606 = vsel %vm1589, %v1558, 0
        %v1609 = vsel %vm1589, %v1559, 0
        %v1612 = vsel %vm1589, %v1560, 0
        %v1615 = vsel %vm1589, %v1561, 0
        %v1618 = vsel %vm1589, %v1562, 0
        %v1621 = vsel %vm1589, %v1563, 0
        %v1624 = vsel %vm1589, %v1564, 0
        %v1627 = vsel %vm1589, %v1565, 0
        %v1630 = vsel %vm1589, %v1566, 0
        %v1633 = vsel %vm1589, %v1567, 0
        %v1636 = vsel %vm1589, %v1568, 0
        %vm1638 = vcmask 1041408
        %v1640 = vsel %vm1638, %v1586, 0
        %1642 = vmatprep.subr.bf16.mxu0 0
        %1643 = vmatpush1.bf16.msra.mxu0 0
        %1644 = vmatprep.subr.bf16.mxu0 0
        %1645 = vmatpush1.bf16.msra.mxu0 0
        %1646 = vmatprep.subr.bf16.mxu0 0
        %1647 = vmatpush1.bf16.msra.mxu0 0
        %1648 = vmatprep.subr.bf16.mxu0 0
        %1649 = vmatpush1.bf16.msra.mxu0 0
        %1650 = vmatprep.subr.bf16.mxu0 0
        %1651 = vmatpush1.bf16.msra.mxu0 0
        %1652 = vmatprep.subr.bf16.mxu0 0
        %1653 = vmatpush1.bf16.msra.mxu0 %v1640
        %1654 = vmatprep.subr.bf16.mxu0 0
        %1655 = vmatpush1.bf16.msra.mxu0 %v1585
        %1656 = vmatprep.subr.bf16.mxu0 0
        %1657 = vmatpush1.bf16.msra.mxu0 %v1584
        %1658 = vmatprep.subr.bf16.mxu0 0
        %1659 = vmatpush2.bf16.msra.mxu0 0
        %1660 = vmatprep.subr.bf16.mxu0 0
        %1661 = vmatpush2.bf16.msra.mxu0 0
        %1662 = vmatprep.subr.bf16.mxu0 0
        %1663 = vmatpush2.bf16.msra.mxu0 0
        %1664 = vmatprep.subr.bf16.mxu0 0
        %1665 = vmatpush2.bf16.msra.mxu0 0
        %1666 = vmatprep.subr.bf16.mxu0 0
        %1667 = vmatpush2.bf16.msra.mxu0 0
        %1668 = vmatprep.subr.bf16.mxu0 0
        %1669 = vmatpush2.bf16.msra.mxu0 0
        %1670 = vmatprep.subr.bf16.mxu0 0
        %1671 = vmatpush2.bf16.msra.mxu0 0
        %1672 = vmatprep.subr.bf16.mxu0 0
        %1673 = vmatpush2.bf16.msra.mxu0 0
        %1674 = vmatprep.mubr.bf16.mxu0 0
        %1675 = vmatmul.mubr.bf16.gmra.mxu0 %v1591
        %v1676 = vpop.f32.mrf.mxu0
        %v1677 = vadd.f32 0.0, %v1676
        %v1678 = vpop.f32.mrf.mxu0
        %v1679 = vpop.f32.mrf.mxu0
        %v1680 = vadd.f32 0.0, %v1679
        %v1681 = vpop.f32.mrf.mxu0
        %1682 = vmatprep.mubr.bf16.mxu0 0
        %1683 = vmatmul.mubr.bf16.gmra.mxu0 %v1594
        %v1684 = vpop.f32.mrf.mxu0
        %v1685 = vadd.f32 0.0, %v1684
        %v1686 = vpop.f32.mrf.mxu0
        %v1687 = vpop.f32.mrf.mxu0
        %v1688 = vadd.f32 0.0, %v1687
        %v1689 = vpop.f32.mrf.mxu0
        %1690 = vmatprep.mubr.bf16.mxu0 0
        %1691 = vmatmul.mubr.bf16.gmra.mxu0 %v1597
        %v1692 = vpop.f32.mrf.mxu0
        %v1693 = vadd.f32 0.0, %v1692
        %v1694 = vpop.f32.mrf.mxu0
        %v1695 = vpop.f32.mrf.mxu0
        %v1696 = vadd.f32 0.0, %v1695
        %v1697 = vpop.f32.mrf.mxu0
        %1698 = vmatprep.mubr.bf16.mxu0 0
        %1699 = vmatmul.mubr.bf16.gmra.mxu0 %v1600
        %v1700 = vpop.f32.mrf.mxu0
        %v1701 = vadd.f32 0.0, %v1700
        %v1702 = vpop.f32.mrf.mxu0
        %v1703 = vpop.f32.mrf.mxu0
        %v1704 = vadd.f32 0.0, %v1703
        %v1705 = vpop.f32.mrf.mxu0
        %1706 = vmatprep.mubr.bf16.mxu0 0
        %1707 = vmatmul.mubr.bf16.gmra.mxu0 %v1603
        %v1708 = vpop.f32.mrf.mxu0
        %v1709 = vadd.f32 0.0, %v1708
        %v1710 = vpop.f32.mrf.mxu0
        %v1711 = vpop.f32.mrf.mxu0
        %v1712 = vadd.f32 0.0, %v1711
        %v1713 = vpop.f32.mrf.mxu0
        %1714 = vmatprep.mubr.bf16.mxu0 0
        %1715 = vmatmul.mubr.bf16.gmra.mxu0 %v1606
        %v1716 = vpop.f32.mrf.mxu0
        %v1717 = vadd.f32 0.0, %v1716
        %v1718 = vpop.f32.mrf.mxu0
        %v1719 = vpop.f32.mrf.mxu0
        %v1720 = vadd.f32 0.0, %v1719
        %v1721 = vpop.f32.mrf.mxu0
        %1722 = vmatprep.mubr.bf16.mxu0 0
        %1723 = vmatmul.mubr.bf16.gmra.mxu0 %v1609
        %v1724 = vpop.f32.mrf.mxu0
        %v1725 = vadd.f32 0.0, %v1724
        %v1726 = vpop.f32.mrf.mxu0
        %v1727 = vpop.f32.mrf.mxu0
        %v1728 = vadd.f32 0.0, %v1727
        %v1729 = vpop.f32.mrf.mxu0
        %1730 = vmatprep.mubr.bf16.mxu0 0
        %1731 = vmatmul.mubr.bf16.gmra.mxu0 %v1612
        %v1732 = vpop.f32.mrf.mxu0
        %v1733 = vadd.f32 0.0, %v1732
        %v1734 = vpop.f32.mrf.mxu0
        %v1735 = vpop.f32.mrf.mxu0
        %v1736 = vadd.f32 0.0, %v1735
        %v1737 = vpop.f32.mrf.mxu0
        %1738 = vmatprep.mubr.bf16.mxu0 0
        %1739 = vmatmul.mubr.bf16.gmra.mxu0 %v1615
        %v1740 = vpop.f32.mrf.mxu0
        %v1741 = vadd.f32 0.0, %v1740
        %v1742 = vpop.f32.mrf.mxu0
        %v1743 = vpop.f32.mrf.mxu0
        %v1744 = vadd.f32 0.0, %v1743
        %v1745 = vpop.f32.mrf.mxu0
        %1746 = vmatprep.mubr.bf16.mxu0 0
        %1747 = vmatmul.mubr.bf16.gmra.mxu0 %v1618
        %v1748 = vpop.f32.mrf.mxu0
        %v1749 = vadd.f32 0.0, %v1748
        %v1750 = vpop.f32.mrf.mxu0
        %v1751 = vpop.f32.mrf.mxu0
        %v1752 = vadd.f32 0.0, %v1751
        %v1753 = vpop.f32.mrf.mxu0
        %1754 = vmatprep.mubr.bf16.mxu0 0
        %1755 = vmatmul.mubr.bf16.gmra.mxu0 %v1621
        %v1756 = vpop.f32.mrf.mxu0
        %v1757 = vadd.f32 0.0, %v1756
        %v1758 = vpop.f32.mrf.mxu0
        %v1759 = vpop.f32.mrf.mxu0
        %v1760 = vadd.f32 0.0, %v1759
        %v1761 = vpop.f32.mrf.mxu0
        %1762 = vmatprep.mubr.bf16.mxu0 0
        %1763 = vmatmul.mubr.bf16.gmra.mxu0 %v1624
        %v1764 = vpop.f32.mrf.mxu0
        %v1765 = vadd.f32 0.0, %v1764
        %v1766 = vpop.f32.mrf.mxu0
        %v1767 = vpop.f32.mrf.mxu0
        %v1768 = vadd.f32 0.0, %v1767
        %v1769 = vpop.f32.mrf.mxu0
        %1770 = vmatprep.mubr.bf16.mxu0 0
        %1771 = vmatmul.mubr.bf16.gmra.mxu0 %v1627
        %v1772 = vpop.f32.mrf.mxu0
        %v1773 = vadd.f32 0.0, %v1772
        %v1774 = vpop.f32.mrf.mxu0
        %v1775 = vpop.f32.mrf.mxu0
        %v1776 = vadd.f32 0.0, %v1775
        %v1777 = vpop.f32.mrf.mxu0
        %1778 = vmatprep.mubr.bf16.mxu0 0
        %1779 = vmatmul.mubr.bf16.gmra.mxu0 %v1630
        %v1780 = vpop.f32.mrf.mxu0
        %v1781 = vadd.f32 0.0, %v1780
        %v1782 = vpop.f32.mrf.mxu0
        %v1783 = vpop.f32.mrf.mxu0
        %v1784 = vadd.f32 0.0, %v1783
        %v1785 = vpop.f32.mrf.mxu0
        %1786 = vmatprep.mubr.bf16.mxu0 0
        %1787 = vmatmul.mubr.bf16.gmra.mxu0 %v1633
        %v1788 = vpop.f32.mrf.mxu0
        %v1789 = vadd.f32 0.0, %v1788
        %v1790 = vpop.f32.mrf.mxu0
        %v1791 = vpop.f32.mrf.mxu0
        %v1792 = vadd.f32 0.0, %v1791
        %v1793 = vpop.f32.mrf.mxu0
        %1794 = vmatprep.mubr.bf16.mxu0 0
        %1795 = vmatmul.mubr.bf16.gmra.mxu0 %v1636
        %v1796 = vpop.f32.mrf.mxu0
        %v1797 = vadd.f32 0.0, %v1796
        %v1798 = vpop.f32.mrf.mxu0
        %v1799 = vpop.f32.mrf.mxu0
        %v1800 = vadd.f32 0.0, %v1799
        %v1801 = vpop.f32.mrf.mxu0
        %1802 = vdwg.mxu0
        %v1803 = vsel %vm1289, %v1677, 0.0
        %v1804 = vsel %vm1289, %v1680, 0.0
        %v1805 = vadd.f32 %v1803, %v1804
        %v1806 = vsel %vm1289, %v1685, 0.0
        %v1807 = vadd.f32 %v1805, %v1806
        %v1808 = vsel %vm1289, %v1688, 0.0
        %v1809 = vadd.f32 %v1807, %v1808
        %v1810 = vsel %vm1289, %v1693, 0.0
        %v1811 = vadd.f32 %v1809, %v1810
        %v1812 = vsel %vm1289, %v1696, 0.0
        %v1813 = vadd.f32 %v1811, %v1812
        %v1814 = vsel %vm1289, %v1701, 0.0
        %v1815 = vadd.f32 %v1813, %v1814
        %v1816 = vsel %vm1289, %v1704, 0.0
        %v1817 = vadd.f32 %v1815, %v1816
        %v1818 = vsel %vm1289, %v1709, 0.0
        %v1819 = vadd.f32 %v1817, %v1818
        %v1820 = vsel %vm1289, %v1712, 0.0
        %v1821 = vadd.f32 %v1819, %v1820
        %v1822 = vsel %vm1289, %v1717, 0.0
        %v1823 = vadd.f32 %v1821, %v1822
        %v1824 = vsel %vm1289, %v1720, 0.0
        %v1825 = vadd.f32 %v1823, %v1824
        %v1826 = vsel %vm1289, %v1725, 0.0
        %v1827 = vadd.f32 %v1825, %v1826
        %v1828 = vsel %vm1289, %v1728, 0.0
        %v1829 = vadd.f32 %v1827, %v1828
        %v1830 = vsel %vm1289, %v1733, 0.0
        %v1831 = vadd.f32 %v1829, %v1830
        %v1832 = vsel %vm1289, %v1736, 0.0
        %v1833 = vadd.f32 %v1831, %v1832
        %v1834 = vsel %vm1289, %v1741, 0.0
        %v1835 = vadd.f32 %v1833, %v1834
        %v1836 = vsel %vm1289, %v1744, 0.0
        %v1837 = vadd.f32 %v1835, %v1836
        %v1838 = vsel %vm1289, %v1749, 0.0
        %v1839 = vadd.f32 %v1837, %v1838
        %v1840 = vsel %vm1289, %v1752, 0.0
        %v1841 = vadd.f32 %v1839, %v1840
        %v1842 = vsel %vm1289, %v1757, 0.0
        %v1843 = vadd.f32 %v1841, %v1842
        %v1844 = vsel %vm1289, %v1760, 0.0
        %v1845 = vadd.f32 %v1843, %v1844
        %v1846 = vsel %vm1289, %v1765, 0.0
        %v1847 = vadd.f32 %v1845, %v1846
        %v1848 = vsel %vm1289, %v1768, 0.0
        %v1849 = vadd.f32 %v1847, %v1848
        %v1850 = vsel %vm1289, %v1773, 0.0
        %v1851 = vadd.f32 %v1849, %v1850
        %v1852 = vsel %vm1289, %v1776, 0.0
        %v1853 = vadd.f32 %v1851, %v1852
        %v1854 = vsel %vm1289, %v1781, 0.0
        %v1855 = vadd.f32 %v1853, %v1854
        %v1856 = vsel %vm1289, %v1784, 0.0
        %v1857 = vadd.f32 %v1855, %v1856
        %v1858 = vsel %vm1289, %v1789, 0.0
        %v1859 = vadd.f32 %v1857, %v1858
        %v1860 = vsel %vm1289, %v1792, 0.0
        %v1861 = vadd.f32 %v1859, %v1860
        %v1862 = vsel %vm1289, %v1797, 0.0
        %v1863 = vadd.f32 %v1861, %v1862
        %v1864 = vsel %vm1289, %v1800, 0.0
        %v1865 = vadd.f32 %v1863, %v1864
        %v1866 = vrot.slane %v1865, 4
        %v1867 = vadd.f32 %v1865, %v1866
        %v1868 = vrot.slane %v1867, 2
        %v1869 = vadd.f32 %v1867, %v1868
        %v1870 = vrot.slane %v1869, 1
        %v1871 = vadd.f32 %v1869, %v1870
        %v1872 = vmul.f32 %v1677, %v1677
        %v1873 = vmul.f32 %v1680, %v1680
        %v1874 = vmul.f32 %v1685, %v1685
        %v1875 = vmul.f32 %v1688, %v1688
        %v1876 = vmul.f32 %v1693, %v1693
        %v1877 = vmul.f32 %v1696, %v1696
        %v1878 = vmul.f32 %v1701, %v1701
        %v1879 = vmul.f32 %v1704, %v1704
        %v1880 = vmul.f32 %v1709, %v1709
        %v1881 = vmul.f32 %v1712, %v1712
        %v1882 = vmul.f32 %v1717, %v1717
        %v1883 = vmul.f32 %v1720, %v1720
        %v1884 = vmul.f32 %v1725, %v1725
        %v1885 = vmul.f32 %v1728, %v1728
        %v1886 = vmul.f32 %v1733, %v1733
        %v1887 = vmul.f32 %v1736, %v1736
        %v1888 = vmul.f32 %v1741, %v1741
        %v1889 = vmul.f32 %v1744, %v1744
        %v1890 = vmul.f32 %v1749, %v1749
        %v1891 = vmul.f32 %v1752, %v1752
        %v1892 = vmul.f32 %v1757, %v1757
        %v1893 = vmul.f32 %v1760, %v1760
        %v1894 = vmul.f32 %v1765, %v1765
        %v1895 = vmul.f32 %v1768, %v1768
        %v1896 = vmul.f32 %v1773, %v1773
        %v1897 = vmul.f32 %v1776, %v1776
        %v1898 = vmul.f32 %v1781, %v1781
        %v1899 = vmul.f32 %v1784, %v1784
        %v1900 = vmul.f32 %v1789, %v1789
        %v1901 = vmul.f32 %v1792, %v1792
        %v1902 = vmul.f32 %v1797, %v1797
        %v1903 = vmul.f32 %v1800, %v1800
        %v1904 = vsel %vm1289, %v1872, 0.0
        %v1905 = vsel %vm1289, %v1873, 0.0
        %v1906 = vadd.f32 %v1904, %v1905
        %v1907 = vsel %vm1289, %v1874, 0.0
        %v1908 = vadd.f32 %v1906, %v1907
        %v1909 = vsel %vm1289, %v1875, 0.0
        %v1910 = vadd.f32 %v1908, %v1909
        %v1911 = vsel %vm1289, %v1876, 0.0
        %v1912 = vadd.f32 %v1910, %v1911
        %v1913 = vsel %vm1289, %v1877, 0.0
        %v1914 = vadd.f32 %v1912, %v1913
        %v1915 = vsel %vm1289, %v1878, 0.0
        %v1916 = vadd.f32 %v1914, %v1915
        %v1917 = vsel %vm1289, %v1879, 0.0
        %v1918 = vadd.f32 %v1916, %v1917
        %v1919 = vsel %vm1289, %v1880, 0.0
        %v1920 = vadd.f32 %v1918, %v1919
        %v1921 = vsel %vm1289, %v1881, 0.0
        %v1922 = vadd.f32 %v1920, %v1921
        %v1923 = vsel %vm1289, %v1882, 0.0
        %v1924 = vadd.f32 %v1922, %v1923
        %v1925 = vsel %vm1289, %v1883, 0.0
        %v1926 = vadd.f32 %v1924, %v1925
        %v1927 = vsel %vm1289, %v1884, 0.0
        %v1928 = vadd.f32 %v1926, %v1927
        %v1929 = vsel %vm1289, %v1885, 0.0
        %v1930 = vadd.f32 %v1928, %v1929
        %v1931 = vsel %vm1289, %v1886, 0.0
        %v1932 = vadd.f32 %v1930, %v1931
        %v1933 = vsel %vm1289, %v1887, 0.0
        %v1934 = vadd.f32 %v1932, %v1933
        %v1935 = vsel %vm1289, %v1888, 0.0
        %v1936 = vadd.f32 %v1934, %v1935
        %v1937 = vsel %vm1289, %v1889, 0.0
        %v1938 = vadd.f32 %v1936, %v1937
        %v1939 = vsel %vm1289, %v1890, 0.0
        %v1940 = vadd.f32 %v1938, %v1939
        %v1941 = vsel %vm1289, %v1891, 0.0
        %v1942 = vadd.f32 %v1940, %v1941
        %v1943 = vsel %vm1289, %v1892, 0.0
        %v1944 = vadd.f32 %v1942, %v1943
        %v1945 = vsel %vm1289, %v1893, 0.0
        %v1946 = vadd.f32 %v1944, %v1945
        %v1947 = vsel %vm1289, %v1894, 0.0
        %v1948 = vadd.f32 %v1946, %v1947
        %v1949 = vsel %vm1289, %v1895, 0.0
        %v1950 = vadd.f32 %v1948, %v1949
        %v1951 = vsel %vm1289, %v1896, 0.0
        %v1952 = vadd.f32 %v1950, %v1951
        %v1953 = vsel %vm1289, %v1897, 0.0
        %v1954 = vadd.f32 %v1952, %v1953
        %v1955 = vsel %vm1289, %v1898, 0.0
        %v1956 = vadd.f32 %v1954, %v1955
        %v1957 = vsel %vm1289, %v1899, 0.0
        %v1958 = vadd.f32 %v1956, %v1957
        %v1959 = vsel %vm1289, %v1900, 0.0
        %v1960 = vadd.f32 %v1958, %v1959
        %v1961 = vsel %vm1289, %v1901, 0.0
        %v1962 = vadd.f32 %v1960, %v1961
        %v1963 = vsel %vm1289, %v1902, 0.0
        %v1964 = vadd.f32 %v1962, %v1963
        %v1965 = vsel %vm1289, %v1903, 0.0
        %v1966 = vadd.f32 %v1964, %v1965
        %v1967 = vrot.slane %v1966, 4
        %v1968 = vadd.f32 %v1966, %v1967
        %v1969 = vrot.slane %v1968, 2
        %v1970 = vadd.f32 %v1968, %v1969
        %v1971 = vrot.slane %v1970, 1
        %v1972 = vadd.f32 %v1970, %v1971
        %v1973 = vld [vmem:[#allocation2] sm:$0x3]
        %vm1974 = vcmask 1040384
        %v1975 = vsel %vm1974, %v1871, %v1972
        %v1976 = vadd.f32 %v1973, %v1975
        %vm1977 = vcmask 25600
        %1978 = vst.msk [vmem:[#allocation2] sm:$0x3] %vm1977, %v1976
        %v1979 = vpack.c.bf16 %v1680, %v1677
        %v1980 = vpack.c.bf16 %v1688, %v1685
        %v1981 = vpack.c.bf16 %v1696, %v1693
        %v1982 = vpack.c.bf16 %v1704, %v1701
        %v1983 = vpack.c.bf16 %v1712, %v1709
        %v1984 = vpack.c.bf16 %v1720, %v1717
        %v1985 = vpack.c.bf16 %v1728, %v1725
        %v1986 = vpack.c.bf16 %v1736, %v1733
        %v1987 = vpack.c.bf16 %v1744, %v1741
        %v1988 = vpack.c.bf16 %v1752, %v1749
        %v1989 = vpack.c.bf16 %v1760, %v1757
        %v1990 = vpack.c.bf16 %v1768, %v1765
        %v1991 = vpack.c.bf16 %v1776, %v1773
        %v1992 = vpack.c.bf16 %v1784, %v1781
        %v1993 = vpack.c.bf16 %v1792, %v1789
        %v1994 = vpack.c.bf16 %v1800, %v1797
        %v2011 = vunpack.c.l.b16 %v1979
        %v2012 = vunpack.c.h.b16 %v1979
        %v2013 = vunpack.c.l.b16 %v1980
        %v2014 = vunpack.c.h.b16 %v1980
        %v2015 = vunpack.c.l.b16 %v1981
        %v2016 = vunpack.c.h.b16 %v1981
        %v2017 = vunpack.c.l.b16 %v1982
        %v2018 = vunpack.c.h.b16 %v1982
        %v2019 = vunpack.c.l.b16 %v1983
        %v2020 = vunpack.c.h.b16 %v1983
        %v2021 = vunpack.c.l.b16 %v1984
        %v2022 = vunpack.c.h.b16 %v1984
        %v2023 = vunpack.c.l.b16 %v1985
        %v2024 = vunpack.c.h.b16 %v1985
        %v2025 = vunpack.c.l.b16 %v1986
        %v2026 = vunpack.c.h.b16 %v1986
        %v2027 = vunpack.c.l.b16 %v1987
        %v2028 = vunpack.c.h.b16 %v1987
        %v2029 = vunpack.c.l.b16 %v1988
        %v2030 = vunpack.c.h.b16 %v1988
        %v2031 = vunpack.c.l.b16 %v1989
        %v2032 = vunpack.c.h.b16 %v1989
        %v2033 = vunpack.c.l.b16 %v1990
        %v2034 = vunpack.c.h.b16 %v1990
        %v2035 = vunpack.c.l.b16 %v1991
        %v2036 = vunpack.c.h.b16 %v1991
        %v2037 = vunpack.c.l.b16 %v1992
        %v2038 = vunpack.c.h.b16 %v1992
        %v2039 = vunpack.c.l.b16 %v1993
        %v2040 = vunpack.c.h.b16 %v1993
        %v2041 = vunpack.c.l.b16 %v1994
        %v2042 = vunpack.c.h.b16 %v1994
        %v2043 = vpack.c.b16 %v2011, %v2011
        %v2044 = vpack.c.b16 %v2012, %v2012
        %v2045 = vpack.c.b16 %v2013, %v2013
        %v2046 = vpack.c.b16 %v2014, %v2014
        %v2047 = vpack.c.b16 %v2015, %v2015
        %v2048 = vpack.c.b16 %v2016, %v2016
        %v2049 = vpack.c.b16 %v2017, %v2017
        %v2050 = vpack.c.b16 %v2018, %v2018
        %v2051 = vpack.c.b16 %v2019, %v2019
        %v2052 = vpack.c.b16 %v2020, %v2020
        %v2053 = vpack.c.b16 %v2021, %v2021
        %v2054 = vpack.c.b16 %v2022, %v2022
        %v2055 = vpack.c.b16 %v2023, %v2023
        %v2056 = vpack.c.b16 %v2024, %v2024
        %v2057 = vpack.c.b16 %v2025, %v2025
        %v2058 = vpack.c.b16 %v2026, %v2026
        %v2059 = vpack.c.b16 %v2027, %v2027
        %v2060 = vpack.c.b16 %v2028, %v2028
        %v2061 = vpack.c.b16 %v2029, %v2029
        %v2062 = vpack.c.b16 %v2030, %v2030
        %v2063 = vpack.c.b16 %v2031, %v2031
        %v2064 = vpack.c.b16 %v2032, %v2032
        %v2065 = vpack.c.b16 %v2033, %v2033
        %v2066 = vpack.c.b16 %v2034, %v2034
        %v2067 = vpack.c.b16 %v2035, %v2035
        %v2068 = vpack.c.b16 %v2036, %v2036
        %v2069 = vpack.c.b16 %v2037, %v2037
        %v2070 = vpack.c.b16 %v2038, %v2038
        %v2071 = vpack.c.b16 %v2039, %v2039
        %v2072 = vpack.c.b16 %v2040, %v2040
        %v2073 = vpack.c.b16 %v2041, %v2041
        %v2074 = vpack.c.b16 %v2042, %v2042
        %vm2107 = vcmask 27648
        %2108 = vst.msk [vmem:[%s169] sm:$0xf] %vm2107, %v2043
        %2109 = vst.msk [vmem:[%s169 + $0x4] sm:$0xf] %vm2107, %v2044
        %2110 = vst.msk [vmem:[%s169 + $0x8] sm:$0xf] %vm2107, %v2045
        %2111 = vst.msk [vmem:[%s169 + $0xc] sm:$0xf] %vm2107, %v2046
        %2112 = vst.msk [vmem:[%s169 + $0x10] sm:$0xf] %vm2107, %v2047
        %2113 = vst.msk [vmem:[%s169 + $0x14] sm:$0xf] %vm2107, %v2048
        %2114 = vst.msk [vmem:[%s169 + $0x18] sm:$0xf] %vm2107, %v2049
        %2115 = vst.msk [vmem:[%s169 + $0x1c] sm:$0xf] %vm2107, %v2050
        %2116 = vst.msk [vmem:[%s169 + $0x20] sm:$0xf] %vm2107, %v2051
        %2117 = vst.msk [vmem:[%s169 + $0x24] sm:$0xf] %vm2107, %v2052
        %2118 = vst.msk [vmem:[%s169 + $0x28] sm:$0xf] %vm2107, %v2053
        %2119 = vst.msk [vmem:[%s169 + $0x2c] sm:$0xf] %vm2107, %v2054
        %2120 = vst.msk [vmem:[%s169 + $0x30] sm:$0xf] %vm2107, %v2055
        %2121 = vst.msk [vmem:[%s169 + $0x34] sm:$0xf] %vm2107, %v2056
        %2122 = vst.msk [vmem:[%s169 + $0x38] sm:$0xf] %vm2107, %v2057
        %2123 = vst.msk [vmem:[%s169 + $0x3c] sm:$0xf] %vm2107, %v2058
        %2124 = vst.msk [vmem:[%s169 + $0x40] sm:$0xf] %vm2107, %v2059
        %2125 = vst.msk [vmem:[%s169 + $0x44] sm:$0xf] %vm2107, %v2060
        %2126 = vst.msk [vmem:[%s169 + $0x48] sm:$0xf] %vm2107, %v2061
        %2127 = vst.msk [vmem:[%s169 + $0x4c] sm:$0xf] %vm2107, %v2062
        %2128 = vst.msk [vmem:[%s169 + $0x50] sm:$0xf] %vm2107, %v2063
        %2129 = vst.msk [vmem:[%s169 + $0x54] sm:$0xf] %vm2107, %v2064
        %2130 = vst.msk [vmem:[%s169 + $0x58] sm:$0xf] %vm2107, %v2065
        %2131 = vst.msk [vmem:[%s169 + $0x5c] sm:$0xf] %vm2107, %v2066
        %2132 = vst.msk [vmem:[%s169 + $0x60] sm:$0xf] %vm2107, %v2067
        %2133 = vst.msk [vmem:[%s169 + $0x64] sm:$0xf] %vm2107, %v2068
        %2134 = vst.msk [vmem:[%s169 + $0x68] sm:$0xf] %vm2107, %v2069
        %2135 = vst.msk [vmem:[%s169 + $0x6c] sm:$0xf] %vm2107, %v2070
        %2136 = vst.msk [vmem:[%s169 + $0x70] sm:$0xf] %vm2107, %v2071
        %2137 = vst.msk [vmem:[%s169 + $0x74] sm:$0xf] %vm2107, %v2072
        %2138 = vst.msk [vmem:[%s169 + $0x78] sm:$0xf] %vm2107, %v2073
        %2139 = vst.msk [vmem:[%s169 + $0x7c] sm:$0xf] %vm2107, %v2074
        %p2140 = scmp.lt.s32.totalorder %s16, 1
        %s2141 = scalar_select %p2140, %s16, 1
        %s2142 = smul.addr %s2141, 32
        %s2143 = smul.addr %s2142, 4
        %s2144 = scalar_lea.vmem %s2, %s2143
        // Predicated region
        $region33: #{tpu_custom_call.1} parent=27 // pred_check
          %p2145 = pneg %p81
        $region34: #{tpu_custom_call.1} parent=27 // pred_check_branch
          %2147 = sbr.rel (%p2145) target = $region36
        $region35: #{tpu_custom_call.1} parent=27 // pred_region
          _
        $region36: #{tpu_custom_call.1} parent=27 // pred_fallthru
          _
        // Predicated region
        $region37: #{tpu_custom_call.1} parent=27 // pred_check
          %p2148 = pneg %p102
        $region38: #{tpu_custom_call.1} parent=27 // pred_check_branch
          %2150 = sbr.rel (%p2148) target = $region40
        $region39: #{tpu_custom_call.1} parent=27 // pred_region
          %s2152 = ssub.s32 32, 32
          %2153 = vsyncadd [#allocation3], %s2152
          %s2155 = sshll.u32 [#allocation2], 4
          %s2156 = int_to_ptr.vmem [resolvable:$true] %s2155
          %2158 = dma.vmem_to_hbm [thread:$0]  %s2156, 32, %s3, [#allocation3]
        $region40: #{tpu_custom_call.1} parent=27 // pred_fallthru
          _
        // Predicated region
        $region41: #{tpu_custom_call.1} parent=27 // pred_check
          %p2159 = pneg %p102
        $region42: #{tpu_custom_call.1} parent=27 // pred_check_branch
          %2161 = sbr.rel (%p2159) target = $region44
        $region43: #{tpu_custom_call.1} parent=27 // pred_region
          %2162 = dma.done [#allocation3], 32
        $region44: #{tpu_custom_call.1} parent=27 // pred_fallthru
          _
      $region28: #{tpu_custom_call.1} parent=5 // pred_fallthru
        _
      %p2163 = scmp.le.s32.totalorder 2, %s11
      // Predicated region
      $region45: #{tpu_custom_call.1} parent=5 // pred_check
        %p2164 = pneg %p2163
      $region46: #{tpu_custom_call.1} parent=5 // pred_check_branch
        %2166 = sbr.rel (%p2164) target = $region48
      $region47: #{tpu_custom_call.1} parent=5 // pred_region
        %s2167 = ssub.s32 %s11, 2
        // Predicated region
        $region49: #{tpu_custom_call.1} parent=47 // pred_check
          %p2168 = pneg %p87
        $region50: #{tpu_custom_call.1} parent=47 // pred_check_branch
          %2170 = sbr.rel (%p2168) target = $region52
        $region51: #{tpu_custom_call.1} parent=47 // pred_region
          %p2171 = scmp.lt.s32.totalorder %s17, 1
          %s2172 = scalar_select %p2171, %s17, 1
          %s2173 = smul.addr %s2172, 32
          %s2174 = smul.addr %s2173, 4
          %s2175 = scalar_lea.vmem %s2, %s2174
        $region52: #{tpu_custom_call.1} parent=47 // pred_fallthru
          _
      $region48: #{tpu_custom_call.1} parent=5 // pred_fallthru
        _
    $region6: #{tpu_custom_call.1} parent=1 // loop_footer
      %s15 = sadd.s32 1, %s11
    $region7: #{tpu_custom_call.1} parent=1 // loop_footer_branch
      %10 = sbr.rel target = $region3
    $region8: #{tpu_custom_call.1} parent=1 // loop_exit
      _
    %2176 = vsyncpa [#allocation3], 1
    %s2177 = scalar_lea.sflag [#allocation3], 1
    %2178 = vsyncpa %s2177, 1

</llo_original>
